<compile_context>
chip_gen: v5e
topology: v5e:2x2
jax: 0.10.0
libtpu: 0.0.40
codegen_flags: <defaults>
</compile_context>

<pallas_src>
import jax
import jax.numpy as jnp
from jax import lax
from jax.experimental import pallas as pl
from jax.experimental.pallas import tpu as pltpu


def _round_up(x, m):
    return ((x + m - 1) // m) * m


# ----------------------------------------------------------------------------- #
# Pallas kernel: one grid step == one GraphTripleConv layer; head on last step
# ----------------------------------------------------------------------------- #
def cgip_fused_kernel(obj0_ref, pred0_ref,
                      so_col_ref, so_row_ref,
                      oimg_row_ref, timg_row_ref, flat_row_ref,
                      inv_deg_ref, inv_ocnt_ref, inv_tcnt_ref,
                      w1a_ref, b1a_ref, w1b_ref, b1b_ref,
                      w2a_ref, b2a_ref, w2b_ref, b2b_ref,
                      wpo_ref, wpp_ref, bp_ref,
                      glob_ref, local_ref,
                      g_scr, sc_scr, obj_scr, pred_scr):
    f32, bf16 = jnp.float32, jnp.bfloat16
    l = pl.program_id(0)
    n_layers = pl.num_programs(0)

    Tp, Dp = pred_scr.shape
    Op = obj_scr.shape[0]
    Hp = w2a_ref.shape[1]
    B = glob_ref.shape[0]
    BMp = local_ref.shape[0]

    def mxu(a, b):
        # bf16 operands on the MXU, f32 accumulation.
        return jnp.dot(a.astype(bf16), b.astype(bf16),
                       preferred_element_type=f32)

    # --- one-time init: activations into persistent VMEM scratch; merged
    #     gather / scatter one-hots built in-kernel from int32 indices.
    @pl.when(l == 0)
    def _init():
        obj_scr[...] = obj0_ref[...]
        pred_scr[...] = pred0_ref[...]
        g_scr[...] = (lax.broadcasted_iota(jnp.int32, (2 * Tp, Op), 1)
                      == so_col_ref[...]).astype(bf16)          # (2T, O) gather
        sc_scr[...] = (lax.broadcasted_iota(jnp.int32, (Op, 2 * Tp), 0)
                       == so_row_ref[...]).astype(bf16)         # (O, 2T) scatter

    obj = obj_scr[...]        # (Op, Dp) f32
    pred = pred_scr[...]      # (Tp, Dp) f32
    gmat = g_scr[...]         # (2Tp, Op) bf16
    scmat = sc_scr[...]       # (Op, 2Tp) bf16

    # gather [obj[s]; obj[o]] with ONE MXU push
    so_cur = mxu(gmat, obj)                                     # (2Tp, Dp)
    cur_s = so_cur[:Tp]
    cur_o = so_cur[Tp:]

    # net1 / layer 0: distribute W1a over the (implicit) concat -> no concat
    w1a_l = w1a_ref[0]                                          # (3, Dp, Hp)
    h1 = jnp.maximum(mxu(cur_s, w1a_l[0]) + mxu(pred, w1a_l[1])
                     + mxu(cur_o, w1a_l[2]) + b1a_ref[0], 0.0)  # (Tp, Hp)

    # net1 / layer 1: lane-tile-aligned column slices (Hp, Dp multiples of 128)
    t2 = jnp.maximum(mxu(h1, w1b_ref[0]) + b1b_ref[0], 0.0)     # (Tp, 2Hp+Dp)
    new_s = t2[:, :Hp]
    new_p = t2[:, Hp:Hp + Dp]
    new_o = t2[:, Hp + Dp:]

    # scatter-add pooling with ONE (O,2T)x(2T,H) MXU push; exact average
    pooled = mxu(scmat, jnp.concatenate([new_s, new_o], axis=0)) \
        * inv_deg_ref[...]                                      # (Op, Hp)

    # net2
    h2 = jnp.maximum(mxu(pooled, w2a_ref[0]) + b2a_ref[0], 0.0)      # (Op, Hp)
    new_obj = jnp.maximum(mxu(h2, w2b_ref[0]) + b2b_ref[0], 0.0)     # (Op, Dp)

    obj_scr[...] = new_obj
    pred_scr[...] = new_p

    # --- head: per-image pooling + projection + local features (last step)
    @pl.when(l == n_layers - 1)
    def _head():
        oimg_oh = (lax.broadcasted_iota(jnp.int32, (B, Op), 0)
                   == oimg_row_ref[...]).astype(bf16)
        timg_oh = (lax.broadcasted_iota(jnp.int32, (B, Tp), 0)
                   == timg_row_ref[...]).astype(bf16)
        obj_fea = mxu(oimg_oh, new_obj) * inv_ocnt_ref[...]     # (B, Dp)
        pred_fea = mxu(timg_oh, new_p) * inv_tcnt_ref[...]      # (B, Dp)
        glob_ref[...] = (mxu(obj_fea, wpo_ref[...])
                         + mxu(pred_fea, wpp_ref[...]) + bp_ref[...])

        # local triple features: merged gather + one lane-dense output matmul
        so_vec = mxu(gmat, new_obj)                              # (2Tp, Dp)
        triple = jnp.concatenate([so_vec[:Tp], new_p, so_vec[Tp:]], axis=1)
        assign = (lax.broadcasted_iota(jnp.int32, (BMp, Tp), 0)
                  == flat_row_ref[...]).astype(bf16)
        local_ref[...] = mxu(assign, triple)                     # (BMp, 3Dp)


# ----------------------------------------------------------------------------- #
# Wrapper: embedding gathers, index/count math, padding, weight stacking (glue)
# ----------------------------------------------------------------------------- #
def cgip_forward(params, image, objs, boxes, triples, obj_to_img, triples_to_img,
                 max_sample_per_img):
    """Mirrors CGIPModel.forward: returns (graph_local_fea, graph_global_fea)."""
    del boxes  # not used by CGIPModel.encode_graph_local_global
    f32, i32, bf16 = jnp.float32, jnp.int32, jnp.bfloat16
    B = image.shape[0]
    M = max_sample_per_img
    D = params["obj_emb"].shape[1]
    H = params["gconv_layers"][0]["w2a"].shape[0]
    L = len(params["gconv_layers"])

    s_idx = triples[:, 0].astype(i32)
    p_idx = triples[:, 1].astype(i32)
    o_idx = triples[:, 2].astype(i32)
    T = triples.shape[0]
    O = objs.shape[0]

    # lane-pad feature dims to 128, sublane-pad row dims to 8
    Dp, Hp = _round_up(D, 128), _round_up(H, 128)
    Op, Tp = _round_up(O, 8), _round_up(T, 8)
    BM = B * M
    BMp = _round_up(BM, 8)

    # embedding gathers (glue) + zero-padded activations
    obj_vecs = params["obj_emb"][objs].astype(f32)
    pred_vecs = params["pred_emb"][p_idx].astype(f32)
    obj_p = jnp.zeros((Op, Dp), f32).at[:O, :D].set(obj_vecs)
    pred_p = jnp.zeros((Tp, Dp), f32).at[:T, :D].set(pred_vecs)

    def pad_idx(v, n):  # pad with -1 (matches no one-hot row/column)
        return jnp.full((n,), -1, i32).at[:v.shape[0]].set(v.astype(i32))

    so = jnp.concatenate([pad_idx(s_idx, Tp), pad_idx(o_idx, Tp)])  # (2Tp,)
    so_col = so.reshape(2 * Tp, 1)
    so_row = so.reshape(1, 2 * Tp)
    oimg_row = pad_idx(obj_to_img, Op).reshape(1, Op)
    timg_row = pad_idx(triples_to_img, Tp).reshape(1, Tp)

    # create_tensor_by_assign_samples_to_img slot logic (in order, truncate @ M)
    t_ar = jnp.arange(T)
    slot = jnp.sum(((triples_to_img[None, :] == triples_to_img[:, None])
                    & (t_ar[None, :] < t_ar[:, None])).astype(i32), axis=1)
    flat = jnp.where(slot < M, triples_to_img.astype(i32) * M + slot, -1)
    flat_row = pad_idx(flat, Tp).reshape(1, Tp)

    # exact reciprocal counts (review: no approx reciprocal in-kernel)
    deg = jnp.zeros((O,), f32).at[s_idx].add(1.0).at[o_idx].add(1.0)
    inv_deg = jnp.ones((Op, 1), f32).at[:O, 0].set(1.0 / jnp.maximum(deg, 1.0))
    ocnt = jnp.zeros((B,), f32).at[obj_to_img].add(1.0)
    tcnt = jnp.zeros((B,), f32).at[triples_to_img].add(1.0)
    inv_ocnt = (1.0 / jnp.maximum(ocnt, 1.0)).reshape(B, 1)
    inv_tcnt = (1.0 / jnp.maximum(tcnt, 1.0)).reshape(B, 1)

    # ---- weight padding + per-layer stacking (bf16 matmul operands, f32 bias)
    def pad2(w, r, c):
        return jnp.zeros((r, c), f32).at[:w.shape[0], :w.shape[1]].set(w)

    w1a_l, b1a_l, w1b_l, b1b_l, w2a_l, b2a_l, w2b_l, b2b_l = ([] for _ in range(8))
    for g in params["gconv_layers"]:
        w1a = g["w1a"]  # (3D, H): rows [s | p | o]
        w1a_l.append(jnp.stack([pad2(w1a[0:D], Dp, Hp),
                                pad2(w1a[D:2 * D], Dp, Hp),
                                pad2(w1a[2 * D:3 * D], Dp, Hp)], axis=0))
        b1a_l.append(pad2(g["b1a"], 1, Hp))
        w1b, b1b = g["w1b"], g["b1b"]  # (H, 2H+D): cols [s | p | o]
        w1b_l.append(jnp.concatenate([pad2(w1b[:, :H], Hp, Hp),
                                      pad2(w1b[:, H:H + D], Hp, Dp),
                                      pad2(w1b[:, H + D:], Hp, Hp)], axis=1))
        b1b_l.append(jnp.concatenate([pad2(b1b[:, :H], 1, Hp),
                                      pad2(b1b[:, H:H + D], 1, Dp),
                                      pad2(b1b[:, H + D:], 1, Hp)], axis=1))
        w2a_l.append(pad2(g["w2a"], Hp, Hp))
        b2a_l.append(pad2(g["b2a"], 1, Hp))
        w2b_l.append(pad2(g["w2b"], Hp, Dp))
        b2b_l.append(pad2(g["b2b"], 1, Dp))

    w1a_s = jnp.stack(w1a_l).astype(bf16)      # (L, 3, Dp, Hp)
    b1a_s = jnp.stack(b1a_l)                   # (L, 1, Hp)
    w1b_s = jnp.stack(w1b_l).astype(bf16)      # (L, Hp, 2Hp+Dp)
    b1b_s = jnp.stack(b1b_l)                   # (L, 1, 2Hp+Dp)
    w2a_s = jnp.stack(w2a_l).astype(bf16)      # (L, Hp, Hp)
    b2a_s = jnp.stack(b2a_l)                   # (L, 1, Hp)
    w2b_s = jnp.stack(w2b_l).astype(bf16)      # (L, Hp, Dp)
    b2b_s = jnp.stack(b2b_l)                   # (L, 1, Dp)

    wp = params["wp"]                          # (2D, D) -> split rows, no concat
    wp_o = pad2(wp[:D], Dp, Dp).astype(bf16)
    wp_p = pad2(wp[D:], Dp, Dp).astype(bf16)
    bp = pad2(params["bp"], 1, Dp)

    ins = (obj_p, pred_p, so_col, so_row, oimg_row, timg_row, flat_row,
           inv_deg, inv_ocnt, inv_tcnt,
           w1a_s, b1a_s, w1b_s, b1b_s, w2a_s, b2a_s, w2b_s, b2b_s,
           wp_o, wp_p, bp)

    def full_spec(a):      # whole array, resident across grid steps
        return pl.BlockSpec(a.shape, lambda l, _n=a.ndim: (0,) * _n)

    def layer_spec(a):     # stream one layer's slab per grid step
        return pl.BlockSpec((1,) + a.shape[1:],
                            lambda l, _n=a.ndim: (l,) + (0,) * (_n - 1))

    in_specs = ([full_spec(x) for x in ins[:10]]
                + [layer_spec(x) for x in ins[10:18]]
                + [full_spec(x) for x in ins[18:]])
    out_shape = (jax.ShapeDtypeStruct((B, Dp), f32),
                 jax.ShapeDtypeStruct((BMp, 3 * Dp), f32))
    out_specs = (pl.BlockSpec((B, Dp), lambda l: (0, 0)),
                 pl.BlockSpec((BMp, 3 * Dp), lambda l: (0, 0)))
    scratch = [pltpu.VMEM((2 * Tp, Op), bf16),   # merged gather one-hot
               pltpu.VMEM((Op, 2 * Tp), bf16),   # merged scatter one-hot
               pltpu.VMEM((Op, Dp), f32),        # obj activations
               pltpu.VMEM((Tp, Dp), f32)]        # pred activations

    # cost estimate (advisory) + VMEM limit derived from the actual shapes
    per_layer = (2 * 2 * Tp * Op * Dp + 3 * 2 * Tp * Dp * Hp
                 + 2 * Tp * Hp * (2 * Hp + Dp) + 2 * Op * 2 * Tp * Hp
                 + 2 * Op * Hp * Hp + 2 * Op * Hp * Dp)
    head = (2 * B * Op * Dp + 2 * B * Tp * Dp + 4 * B * Dp * Dp
            + 2 * 2 * Tp * Op * Dp + 2 * BMp * Tp * 3 * Dp)
    flops = L * per_layer + head
    nbytes = lambda x: int(x.size) * x.dtype.itemsize
    bytes_accessed = sum(nbytes(x) for x in ins) + B * Dp * 4 + BMp * 3 * Dp * 4
    layer_bytes = sum(nbytes(x) // L for x in ins[10:18])
    resident = (2 * layer_bytes + sum(nbytes(x) for x in ins[:10])
                + sum(nbytes(x) for x in ins[18:]) + B * Dp * 4 + BMp * 3 * Dp * 4
                + (2 * Tp * Op + Op * 2 * Tp) * 2 + (Op + Tp) * Dp * 4
                + 4 * (2 * Tp * Dp + Tp * Hp + Tp * (2 * Hp + Dp)
                       + 2 * Tp * Hp + 2 * Op * Hp + Op * Dp + Tp * 3 * Dp))
    vmem_limit = int(min(max(2 * resident, 16 * 1024 * 1024), 64 * 1024 * 1024))

    glob_p, local_p = pl.pallas_call(
        cgip_fused_kernel,
        out_shape=out_shape,
        grid_spec=pltpu.PrefetchScalarGridSpec(
            num_scalar_prefetch=0, grid=(L,),
            in_specs=in_specs, out_specs=out_specs, scratch_shapes=scratch),
        compiler_params=pltpu.CompilerParams(
            dimension_semantics=("arbitrary",),
            vmem_limit_bytes=vmem_limit),
        cost_estimate=pl.CostEstimate(flops=int(flops), transcendentals=0,
                                      bytes_accessed=int(bytes_accessed)),
    )(*ins)

    # strip padding (wrapper glue)
    graph_global_fea = glob_p[:, :D]
    loc = local_p[:BM]
    graph_local_fea = jnp.concatenate(
        [loc[:, :D], loc[:, Dp:Dp + D], loc[:, 2 * Dp:2 * Dp + D]],
        axis=1).reshape(B, M, 3 * D)
    # TODO(synk): no v7x dual-TensorCore split yet (layers are sequential; a T-split with cross-core reduction would be needed).
    return graph_local_fea, graph_global_fea


# ----------------------------------------------------------------------------- #
# Deterministic parameter init (shapes follow CGIPModel.__init__)
# ----------------------------------------------------------------------------- #
def _linear(key, fin, fout):
    kw, kb = jax.random.split(key)
    w = jax.random.normal(kw, (fin, fout), jnp.float32) * jnp.sqrt(2.0 / fin)
    b = jax.random.normal(kb, (1, fout), jnp.float32) * 0.01
    return w, b


def init_gconv_params(key, D, H):
    ks = jax.random.split(key, 4)
    w1a, b1a = _linear(ks[0], 3 * D, H)          # net1: Linear(3D, H)
    w1b, b1b = _linear(ks[1], H, 2 * H + D)      # net1: Linear(H, 2H+D)
    w2a, b2a = _linear(ks[2], H, H)              # net2: Linear(H, H)
    w2b, b2b = _linear(ks[3], H, D)              # net2: Linear(H, D)
    return dict(w1a=w1a, b1a=b1a, w1b=w1b, b1b=b1b,
                w2a=w2a, b2a=b2a, w2b=w2b, b2b=b2b)


def init_params(key, num_objs, num_preds, embed_dim, width, layers):
    n_layers = 1 + layers  # graph_conv + graph_net
    ks = jax.random.split(key, 3 + n_layers)
    params = {
        "obj_emb": jax.random.normal(ks[0], (num_objs + 1, embed_dim), jnp.float32),
        "pred_emb": jax.random.normal(ks[1], (num_preds, embed_dim), jnp.float32),
        "gconv_layers": [init_gconv_params(ks[3 + i], embed_dim, width)
                         for i in range(n_layers)],
    }
    kwp, kbp = jax.random.split(ks[2])
    params["wp"] = jax.random.normal(kwp, (2 * embed_dim, embed_dim), jnp.float32) \
        * jnp.sqrt(2.0 / (2 * embed_dim))
    params["bp"] = jax.random.normal(kbp, (1, embed_dim), jnp.float32) * 0.01
    # TODO(synk): logit_scale exists in the module but is never used in forward.
    return params


# ----------------------------------------------------------------------------- #
# Pure-JAX f32 reference (mirrors the PyTorch gather/scatter semantics)
# ----------------------------------------------------------------------------- #
def _gconv_ref(obj_vecs, pred_vecs, edges, p):
    s_idx, o_idx = edges[:, 0], edges[:, 1]
    H = p["w2a"].shape[0]
    D = p["w2b"].shape[1]
    t = jnp.concatenate([obj_vecs[s_idx], pred_vecs, obj_vecs[o_idx]], axis=1)
    h1 = jax.nn.relu(t @ p["w1a"] + p["b1a"])
    t2 = jax.nn.relu(h1 @ p["w1b"] + p["b1b"])
    new_s, new_p, new_o = t2[:, :H], t2[:, H:H + D], t2[:, H + D:]
    O = obj_vecs.shape[0]
    pooled = jnp.zeros((O, H)).at[s_idx].add(new_s).at[o_idx].add(new_o)
    counts = jnp.maximum(jnp.zeros((O,)).at[s_idx].add(1.0).at[o_idx].add(1.0), 1.0)
    pooled = pooled / counts[:, None]
    h2 = jax.nn.relu(pooled @ p["w2a"] + p["b2a"])
    new_obj = jax.nn.relu(h2 @ p["w2b"] + p["b2b"])
    return new_obj, new_p


def cgip_ref(params, image, objs, boxes, triples, obj_to_img, triples_to_img, M):
    del boxes
    B = image.shape[0]
    s_idx, p_idx, o_idx = triples[:, 0], triples[:, 1], triples[:, 2]
    edges = jnp.stack([s_idx, o_idx], axis=1)
    obj_vecs = params["obj_emb"][objs]
    pred_vecs = params["pred_emb"][p_idx]
    for lp_ in params["gconv_layers"]:
        obj_vecs, pred_vecs = _gconv_ref(obj_vecs, pred_vecs, edges, lp_)

    def pool(samples, to_img):
        D = samples.shape[1]
        out = jnp.zeros((B, D)).at[to_img].add(samples)
        cnt = jnp.maximum(jnp.zeros((B,)).at[to_img].add(1.0), 1.0)
        return out / cnt[:, None]

    obj_fea = pool(obj_vecs, obj_to_img)
    pred_fea = pool(pred_vecs, triples_to_img)
    glob = jnp.concatenate([obj_fea, pred_fea], axis=1) @ params["wp"] + params["bp"]

    triple_vec = jnp.concatenate([obj_vecs[s_idx], pred_vecs, obj_vecs[o_idx]], axis=1)
    T, D3 = triple_vec.shape
    t_ar = jnp.arange(T)
    slot = jnp.sum(((triples_to_img[None, :] == triples_to_img[:, None])
                    & (t_ar[None, :] < t_ar[:, None])).astype(jnp.int32), axis=1)
    valid = slot < M
    local = jnp.zeros((B, M, D3)).at[
        jnp.where(valid, triples_to_img, 0), jnp.where(valid, slot, 0)
    ].add(jnp.where(valid[:, None], triple_vec, 0.0))
    return local, glob


# ----------------------------------------------------------------------------- #
# Main
# ----------------------------------------------------------------------------- #
if __name__ == "__main__":
    key = jax.random.PRNGKey(0)

    # small config consistent with the module's constructor
    num_objs, num_preds = 10, 6
    embed_dim, width, layers = 32, 64, 2
    max_sample_per_img = 5
    B, C, Himg, Wimg = 2, 3, 16, 16
    O, T = 8, 8

    ks = jax.random.split(key, 8)
    image = jax.random.normal(ks[0], (B, C, Himg, Wimg), jnp.float32)
    objs = jax.random.randint(ks[1], (O,), 0, num_objs + 1)
    boxes = jax.random.uniform(ks[2], (O, 4), jnp.float32)
    s_idx = jax.random.randint(ks[3], (T,), 0, O)
    o_idx = jax.random.randint(ks[4], (T,), 0, O)
    p_idx = jax.random.randint(ks[5], (T,), 0, num_preds)
    triples = jnp.stack([s_idx, p_idx, o_idx], axis=1)
    obj_to_img = jnp.array([0, 0, 0, 0, 1, 1, 1, 1], jnp.int32)
    triples_to_img = jnp.array([0, 0, 0, 1, 1, 1, 1, 1], jnp.int32)

    params = init_params(ks[6], num_objs, num_preds, embed_dim, width, layers)

    fwd = jax.jit(cgip_forward, static_argnums=(7,))
    local_fea, global_fea = fwd(params, image, objs, boxes, triples,
                                obj_to_img, triples_to_img, max_sample_per_img)
    jax.block_until_ready((local_fea, global_fea))

    # correctness check vs. f32 reference (bf16 MXU operands -> looser tol)
    local_ref, global_ref = cgip_ref(
        params, image, objs, boxes, triples, obj_to_img, triples_to_img,
        max_sample_per_img)

    def _check(a, b, name):
        err = float(jnp.max(jnp.abs(a - b)) / (jnp.max(jnp.abs(b)) + 1e-6))
        assert err < 5e-2, f"{name} mismatch, rel err = {err}"

    _check(local_fea, local_ref, "graph_local_fea")
    _check(global_fea, global_ref, "graph_global_fea")

    assert local_fea.shape == (B, max_sample_per_img, 3 * embed_dim)
    assert global_fea.shape == (B, embed_dim)
    print("KERNEL_OK")
</pallas_src>

<mosaic_0001>
module attributes {stable_mosaic.version = 11 : i64} {
  func.func @cgip_fused_kernel(%arg0: i32, %arg1: memref<8x128xf32, #tpu.memory_space<vmem>>, %arg2: memref<8x128xf32, #tpu.memory_space<vmem>>, %arg3: memref<16x1xi32, #tpu.memory_space<vmem>>, %arg4: memref<1x16xi32, #tpu.memory_space<vmem>>, %arg5: memref<1x8xi32, #tpu.memory_space<vmem>>, %arg6: memref<1x8xi32, #tpu.memory_space<vmem>>, %arg7: memref<1x8xi32, #tpu.memory_space<vmem>>, %arg8: memref<8x1xf32, #tpu.memory_space<vmem>>, %arg9: memref<2x1xf32, #tpu.memory_space<vmem>>, %arg10: memref<2x1xf32, #tpu.memory_space<vmem>>, %arg11: memref<1x3x128x128xbf16, #tpu.memory_space<vmem>>, %arg12: memref<1x1x128xf32, #tpu.memory_space<vmem>>, %arg13: memref<1x128x384xbf16, #tpu.memory_space<vmem>>, %arg14: memref<1x1x384xf32, #tpu.memory_space<vmem>>, %arg15: memref<1x128x128xbf16, #tpu.memory_space<vmem>>, %arg16: memref<1x1x128xf32, #tpu.memory_space<vmem>>, %arg17: memref<1x128x128xbf16, #tpu.memory_space<vmem>>, %arg18: memref<1x1x128xf32, #tpu.memory_space<vmem>>, %arg19: memref<128x128xbf16, #tpu.memory_space<vmem>>, %arg20: memref<128x128xbf16, #tpu.memory_space<vmem>>, %arg21: memref<1x128xf32, #tpu.memory_space<vmem>>, %arg22: memref<2x128xf32, #tpu.memory_space<vmem>>, %arg23: memref<16x384xf32, #tpu.memory_space<vmem>>, %arg24: memref<16x8xbf16, #tpu.memory_space<vmem>>, %arg25: memref<8x16xbf16, #tpu.memory_space<vmem>>, %arg26: memref<8x128xf32, #tpu.memory_space<vmem>>, %arg27: memref<8x128xf32, #tpu.memory_space<vmem>>) attributes {dimension_semantics = [#tpu.dimension_semantics<arbitrary>], iteration_bounds = array<i64: 3>, scalar_prefetch = 0 : i64, scratch_operands = 4 : i64, tpu.core_type = #tpu.core_type<tc>, window_params = [{pipeline_mode = #tpu.pipeline_mode<synchronous>, transform_indices = @transform_0, window_bounds = array<i64: 8, 128>}, {pipeline_mode = #tpu.pipeline_mode<synchronous>, transform_indices = @transform_1, window_bounds = array<i64: 8, 128>}, {pipeline_mode = #tpu.pipeline_mode<synchronous>, transform_indices = @transform_2, window_bounds = array<i64: 16, 1>}, {pipeline_mode = #tpu.pipeline_mode<synchronous>, transform_indices = @transform_3, window_bounds = array<i64: 1, 16>}, {pipeline_mode = #tpu.pipeline_mode<synchronous>, transform_indices = @transform_4, window_bounds = array<i64: 1, 8>}, {pipeline_mode = #tpu.pipeline_mode<synchronous>, transform_indices = @transform_5, window_bounds = array<i64: 1, 8>}, {pipeline_mode = #tpu.pipeline_mode<synchronous>, transform_indices = @transform_6, window_bounds = array<i64: 1, 8>}, {pipeline_mode = #tpu.pipeline_mode<synchronous>, transform_indices = @transform_7, window_bounds = array<i64: 8, 1>}, {pipeline_mode = #tpu.pipeline_mode<synchronous>, transform_indices = @transform_8, window_bounds = array<i64: 2, 1>}, {pipeline_mode = #tpu.pipeline_mode<synchronous>, transform_indices = @transform_9, window_bounds = array<i64: 2, 1>}, {transform_indices = @transform_10, window_bounds = array<i64: 1, 3, 128, 128>}, {transform_indices = @transform_11, window_bounds = array<i64: 1, 1, 128>}, {transform_indices = @transform_12, window_bounds = array<i64: 1, 128, 384>}, {transform_indices = @transform_13, window_bounds = array<i64: 1, 1, 384>}, {transform_indices = @transform_14, window_bounds = array<i64: 1, 128, 128>}, {transform_indices = @transform_15, window_bounds = array<i64: 1, 1, 128>}, {transform_indices = @transform_16, window_bounds = array<i64: 1, 128, 128>}, {transform_indices = @transform_17, window_bounds = array<i64: 1, 1, 128>}, {pipeline_mode = #tpu.pipeline_mode<synchronous>, transform_indices = @transform_18, window_bounds = array<i64: 128, 128>}, {pipeline_mode = #tpu.pipeline_mode<synchronous>, transform_indices = @transform_19, window_bounds = array<i64: 128, 128>}, {pipeline_mode = #tpu.pipeline_mode<synchronous>, transform_indices = @transform_20, window_bounds = array<i64: 1, 128>}, {pipeline_mode = #tpu.pipeline_mode<synchronous>, transform_indices = @transform_21, window_bounds = array<i64: 2, 128>}, {pipeline_mode = #tpu.pipeline_mode<synchronous>, transform_indices = @transform_22, window_bounds = array<i64: 16, 384>}]} {
    %c0_i32 = arith.constant 0 : i32
    %0 = arith.cmpi eq, %arg0, %c0_i32 : i32
    %1 = arith.extui %0 : i1 to i32
    %c0_i32_0 = arith.constant 0 : i32
    %2 = arith.cmpi ne, %1, %c0_i32_0 : i32
    scf.if %2 {
      %c0_51 = arith.constant 0 : index
      %c0_52 = arith.constant 0 : index
      %77 = vector.load %arg1[%c0_51, %c0_52] : memref<8x128xf32, #tpu.memory_space<vmem>>, vector<8x128xf32>
      %c0_53 = arith.constant 0 : index
      %c0_54 = arith.constant 0 : index
      %78 = vector.load %arg26[%c0_53, %c0_54] : memref<8x128xf32, #tpu.memory_space<vmem>>, vector<8x128xf32>
      tpu.vector_store %arg26[%c0_53, %c0_54], %77 {strides = array<i32>} : memref<8x128xf32, #tpu.memory_space<vmem>>, vector<8x128xf32>,
      %c0_55 = arith.constant 0 : index
      %c0_56 = arith.constant 0 : index
      %79 = vector.load %arg2[%c0_55, %c0_56] : memref<8x128xf32, #tpu.memory_space<vmem>>, vector<8x128xf32>
      %c0_57 = arith.constant 0 : index
      %c0_58 = arith.constant 0 : index
      %80 = vector.load %arg27[%c0_57, %c0_58] : memref<8x128xf32, #tpu.memory_space<vmem>>, vector<8x128xf32>
      tpu.vector_store %arg27[%c0_57, %c0_58], %79 {strides = array<i32>} : memref<8x128xf32, #tpu.memory_space<vmem>>, vector<8x128xf32>,
      %81 = tpu.iota {dimensions = array<i32: 1>} : vector<16x8xi32>
      %c0_59 = arith.constant 0 : index
      %c0_60 = arith.constant 0 : index
      %82 = vector.load %arg3[%c0_59, %c0_60] : memref<16x1xi32, #tpu.memory_space<vmem>>, vector<16x1xi32>
      %83 = vector.broadcast %82 : vector<16x1xi32> to vector<16x8xi32>
      %84 = arith.cmpi eq, %81, %83 : vector<16x8xi32>
      %85 = arith.extui %84 : vector<16x8xi1> to vector<16x8xi32>
      %86 = arith.sitofp %85 : vector<16x8xi32> to vector<16x8xf32>
      %87 = arith.truncf %86 : vector<16x8xf32> to vector<16x8xbf16>
      %c0_61 = arith.constant 0 : index
      %c0_62 = arith.constant 0 : index
      %88 = vector.load %arg24[%c0_61, %c0_62] : memref<16x8xbf16, #tpu.memory_space<vmem>>, vector<16x8xbf16>
      tpu.vector_store %arg24[%c0_61, %c0_62], %87 {strides = array<i32>} : memref<16x8xbf16, #tpu.memory_space<vmem>>, vector<16x8xbf16>,
      %89 = tpu.iota {dimensions = array<i32: 0>} : vector<8x16xi32>
      %c0_63 = arith.constant 0 : index
      %c0_64 = arith.constant 0 : index
      %90 = vector.load %arg4[%c0_63, %c0_64] : memref<1x16xi32, #tpu.memory_space<vmem>>, vector<1x16xi32>
      %91 = vector.broadcast %90 : vector<1x16xi32> to vector<8x16xi32>
      %92 = arith.cmpi eq, %89, %91 : vector<8x16xi32>
      %93 = arith.extui %92 : vector<8x16xi1> to vector<8x16xi32>
      %94 = arith.sitofp %93 : vector<8x16xi32> to vector<8x16xf32>
      %95 = arith.truncf %94 : vector<8x16xf32> to vector<8x16xbf16>
      %c0_65 = arith.constant 0 : index
      %c0_66 = arith.constant 0 : index
      %96 = vector.load %arg25[%c0_65, %c0_66] : memref<8x16xbf16, #tpu.memory_space<vmem>>, vector<8x16xbf16>
      tpu.vector_store %arg25[%c0_65, %c0_66], %95 {strides = array<i32>} : memref<8x16xbf16, #tpu.memory_space<vmem>>, vector<8x16xbf16>,
    } else {
    }
    %c0 = arith.constant 0 : index
    %c0_1 = arith.constant 0 : index
    %3 = vector.load %arg26[%c0, %c0_1] : memref<8x128xf32, #tpu.memory_space<vmem>>, vector<8x128xf32>
    %c0_2 = arith.constant 0 : index
    %c0_3 = arith.constant 0 : index
    %4 = vector.load %arg27[%c0_2, %c0_3] : memref<8x128xf32, #tpu.memory_space<vmem>>, vector<8x128xf32>
    %c0_4 = arith.constant 0 : index
    %c0_5 = arith.constant 0 : index
    %5 = vector.load %arg24[%c0_4, %c0_5] : memref<16x8xbf16, #tpu.memory_space<vmem>>, vector<16x8xbf16>
    %c0_6 = arith.constant 0 : index
    %c0_7 = arith.constant 0 : index
    %6 = vector.load %arg25[%c0_6, %c0_7] : memref<8x16xbf16, #tpu.memory_space<vmem>>, vector<8x16xbf16>
    %7 = arith.truncf %3 : vector<8x128xf32> to vector<8x128xbf16>
    %cst = arith.constant dense<0.000000e+00> : vector<16x128xf32>
    %8 = tpu.matmul %5, %7, %cst {dimension_numbers = #tpu.dot_dimension_numbers<[1], [0], [0], [1], [0, 0, 1, 1], [], []>} : vector<16x8xbf16>, vector<8x128xbf16>, vector<16x128xf32> -> vector<16x128xf32>
    %9 = vector.extract_strided_slice %8 {offsets = [0, 0], sizes = [8, 128], strides = [1, 1]} : vector<16x128xf32> to vector<8x128xf32>
    %10 = vector.extract_strided_slice %8 {offsets = [8, 0], sizes = [8, 128], strides = [1, 1]} : vector<16x128xf32> to vector<8x128xf32>
    %c0_8 = arith.constant 0 : index
    %c0_9 = arith.constant 0 : index
    %c0_10 = arith.constant 0 : index
    %c0_11 = arith.constant 0 : index
    %11 = vector.load %arg11[%c0_8, %c0_9, %c0_10, %c0_11] : memref<1x3x128x128xbf16, #tpu.memory_space<vmem>>, vector<1x3x128x128xbf16>
    %12 = vector.shape_cast %11 : vector<1x3x128x128xbf16> to vector<3x128x128xbf16>
    %13 = vector.extract_strided_slice %12 {offsets = [0, 0, 0], sizes = [1, 128, 128], strides = [1, 1, 1]} : vector<3x128x128xbf16> to vector<1x128x128xbf16>
    %14 = vector.shape_cast %13 : vector<1x128x128xbf16> to vector<128x128xbf16>
    %15 = arith.truncf %9 : vector<8x128xf32> to vector<8x128xbf16>
    %cst_12 = arith.constant dense<0.000000e+00> : vector<8x128xf32>
    %16 = tpu.matmul %15, %14, %cst_12 {dimension_numbers = #tpu.dot_dimension_numbers<[1], [0], [0], [1], [0, 0, 1, 1], [], []>} : vector<8x128xbf16>, vector<128x128xbf16>, vector<8x128xf32> -> vector<8x128xf32>
    %17 = vector.extract_strided_slice %12 {offsets = [1, 0, 0], sizes = [1, 128, 128], strides = [1, 1, 1]} : vector<3x128x128xbf16> to vector<1x128x128xbf16>
    %18 = vector.shape_cast %17 : vector<1x128x128xbf16> to vector<128x128xbf16>
    %19 = arith.truncf %4 : vector<8x128xf32> to vector<8x128xbf16>
    %cst_13 = arith.constant dense<0.000000e+00> : vector<8x128xf32>
    %20 = tpu.matmul %19, %18, %cst_13 {dimension_numbers = #tpu.dot_dimension_numbers<[1], [0], [0], [1], [0, 0, 1, 1], [], []>} : vector<8x128xbf16>, vector<128x128xbf16>, vector<8x128xf32> -> vector<8x128xf32>
    %21 = arith.addf %16, %20 : vector<8x128xf32>
    %22 = vector.extract_strided_slice %12 {offsets = [2, 0, 0], sizes = [1, 128, 128], strides = [1, 1, 1]} : vector<3x128x128xbf16> to vector<1x128x128xbf16>
    %23 = vector.shape_cast %22 : vector<1x128x128xbf16> to vector<128x128xbf16>
    %24 = arith.truncf %10 : vector<8x128xf32> to vector<8x128xbf16>
    %cst_14 = arith.constant dense<0.000000e+00> : vector<8x128xf32>
    %25 = tpu.matmul %24, %23, %cst_14 {dimension_numbers = #tpu.dot_dimension_numbers<[1], [0], [0], [1], [0, 0, 1, 1], [], []>} : vector<8x128xbf16>, vector<128x128xbf16>, vector<8x128xf32> -> vector<8x128xf32>
    %26 = arith.addf %21, %25 : vector<8x128xf32>
    %c0_15 = arith.constant 0 : index
    %c0_16 = arith.constant 0 : index
    %c0_17 = arith.constant 0 : index
    %27 = vector.load %arg12[%c0_15, %c0_16, %c0_17] : memref<1x1x128xf32, #tpu.memory_space<vmem>>, vector<1x1x128xf32>
    %28 = vector.shape_cast %27 : vector<1x1x128xf32> to vector<1x128xf32>
    %29 = vector.broadcast %28 : vector<1x128xf32> to vector<8x128xf32>
    %30 = arith.addf %26, %29 : vector<8x128xf32>
    %cst_18 = arith.constant 0.000000e+00 : f32
    %31 = vector.broadcast %cst_18 : f32 to vector<8x128xf32>
    %32 = arith.maximumf %30, %31 : vector<8x128xf32>
    %c0_19 = arith.constant 0 : index
    %c0_20 = arith.constant 0 : index
    %c0_21 = arith.constant 0 : index
    %33 = vector.load %arg13[%c0_19, %c0_20, %c0_21] : memref<1x128x384xbf16, #tpu.memory_space<vmem>>, vector<1x128x384xbf16>
    %34 = vector.shape_cast %33 : vector<1x128x384xbf16> to vector<128x384xbf16>
    %35 = arith.truncf %32 : vector<8x128xf32> to vector<8x128xbf16>
    %cst_22 = arith.constant dense<0.000000e+00> : vector<8x384xf32>
    %36 = tpu.matmul %35, %34, %cst_22 {dimension_numbers = #tpu.dot_dimension_numbers<[1], [0], [0], [1], [0, 0, 1, 1], [], []>} : vector<8x128xbf16>, vector<128x384xbf16>, vector<8x384xf32> -> vector<8x384xf32>
    %c0_23 = arith.constant 0 : index
    %c0_24 = arith.constant 0 : index
    %c0_25 = arith.constant 0 : index
    %37 = vector.load %arg14[%c0_23, %c0_24, %c0_25] : memref<1x1x384xf32, #tpu.memory_space<vmem>>, vector<1x1x384xf32>
    %38 = vector.shape_cast %37 : vector<1x1x384xf32> to vector<1x384xf32>
    %39 = vector.broadcast %38 : vector<1x384xf32> to vector<8x384xf32>
    %40 = arith.addf %36, %39 : vector<8x384xf32>
    %cst_26 = arith.constant 0.000000e+00 : f32
    %41 = vector.broadcast %cst_26 : f32 to vector<8x384xf32>
    %42 = arith.maximumf %40, %41 : vector<8x384xf32>
    %43 = vector.extract_strided_slice %42 {offsets = [0, 0], sizes = [8, 128], strides = [1, 1]} : vector<8x384xf32> to vector<8x128xf32>
    %44 = vector.extract_strided_slice %42 {offsets = [0, 128], sizes = [8, 128], strides = [1, 1]} : vector<8x384xf32> to vector<8x128xf32>
    %45 = vector.extract_strided_slice %42 {offsets = [0, 256], sizes = [8, 128], strides = [1, 1]} : vector<8x384xf32> to vector<8x128xf32>
    %46 = tpu.concatenate %43, %45 in 0 : vector<8x128xf32>, vector<8x128xf32> -> vector<16x128xf32>
    %47 = arith.truncf %46 : vector<16x128xf32> to vector<16x128xbf16>
    %cst_27 = arith.constant dense<0.000000e+00> : vector<8x128xf32>
    %48 = tpu.matmul %6, %47, %cst_27 {dimension_numbers = #tpu.dot_dimension_numbers<[1], [0], [0], [1], [0, 0, 1, 1], [], []>} : vector<8x16xbf16>, vector<16x128xbf16>, vector<8x128xf32> -> vector<8x128xf32>
    %c0_28 = arith.constant 0 : index
    %c0_29 = arith.constant 0 : index
    %49 = vector.load %arg8[%c0_28, %c0_29] : memref<8x1xf32, #tpu.memory_space<vmem>>, vector<8x1xf32>
    %50 = vector.broadcast %49 : vector<8x1xf32> to vector<8x128xf32>
    %51 = arith.mulf %48, %50 : vector<8x128xf32>
    %c0_30 = arith.constant 0 : index
    %c0_31 = arith.constant 0 : index
    %c0_32 = arith.constant 0 : index
    %52 = vector.load %arg15[%c0_30, %c0_31, %c0_32] : memref<1x128x128xbf16, #tpu.memory_space<vmem>>, vector<1x128x128xbf16>
    %53 = vector.shape_cast %52 : vector<1x128x128xbf16> to vector<128x128xbf16>
    %54 = arith.truncf %51 : vector<8x128xf32> to vector<8x128xbf16>
    %cst_33 = arith.constant dense<0.000000e+00> : vector<8x128xf32>
    %55 = tpu.matmul %54, %53, %cst_33 {dimension_numbers = #tpu.dot_dimension_numbers<[1], [0], [0], [1], [0, 0, 1, 1], [], []>} : vector<8x128xbf16>, vector<128x128xbf16>, vector<8x128xf32> -> vector<8x128xf32>
    %c0_34 = arith.constant 0 : index
    %c0_35 = arith.constant 0 : index
    %c0_36 = arith.constant 0 : index
    %56 = vector.load %arg16[%c0_34, %c0_35, %c0_36] : memref<1x1x128xf32, #tpu.memory_space<vmem>>, vector<1x1x128xf32>
    %57 = vector.shape_cast %56 : vector<1x1x128xf32> to vector<1x128xf32>
    %58 = vector.broadcast %57 : vector<1x128xf32> to vector<8x128xf32>
    %59 = arith.addf %55, %58 : vector<8x128xf32>
    %cst_37 = arith.constant 0.000000e+00 : f32
    %60 = vector.broadcast %cst_37 : f32 to vector<8x128xf32>
    %61 = arith.maximumf %59, %60 : vector<8x128xf32>
    %c0_38 = arith.constant 0 : index
    %c0_39 = arith.constant 0 : index
    %c0_40 = arith.constant 0 : index
    %62 = vector.load %arg17[%c0_38, %c0_39, %c0_40] : memref<1x128x128xbf16, #tpu.memory_space<vmem>>, vector<1x128x128xbf16>
    %63 = vector.shape_cast %62 : vector<1x128x128xbf16> to vector<128x128xbf16>
    %64 = arith.truncf %61 : vector<8x128xf32> to vector<8x128xbf16>
    %cst_41 = arith.constant dense<0.000000e+00> : vector<8x128xf32>
    %65 = tpu.matmul %64, %63, %cst_41 {dimension_numbers = #tpu.dot_dimension_numbers<[1], [0], [0], [1], [0, 0, 1, 1], [], []>} : vector<8x128xbf16>, vector<128x128xbf16>, vector<8x128xf32> -> vector<8x128xf32>
    %c0_42 = arith.constant 0 : index
    %c0_43 = arith.constant 0 : index
    %c0_44 = arith.constant 0 : index
    %66 = vector.load %arg18[%c0_42, %c0_43, %c0_44] : memref<1x1x128xf32, #tpu.memory_space<vmem>>, vector<1x1x128xf32>
    %67 = vector.shape_cast %66 : vector<1x1x128xf32> to vector<1x128xf32>
    %68 = vector.broadcast %67 : vector<1x128xf32> to vector<8x128xf32>
    %69 = arith.addf %65, %68 : vector<8x128xf32>
    %cst_45 = arith.constant 0.000000e+00 : f32
    %70 = vector.broadcast %cst_45 : f32 to vector<8x128xf32>
    %71 = arith.maximumf %69, %70 : vector<8x128xf32>
    %c0_46 = arith.constant 0 : index
    %c0_47 = arith.constant 0 : index
    %72 = vector.load %arg26[%c0_46, %c0_47] : memref<8x128xf32, #tpu.memory_space<vmem>>, vector<8x128xf32>
    tpu.vector_store %arg26[%c0_46, %c0_47], %71 {strides = array<i32>} : memref<8x128xf32, #tpu.memory_space<vmem>>, vector<8x128xf32>,
    %c0_48 = arith.constant 0 : index
    %c0_49 = arith.constant 0 : index
    %73 = vector.load %arg27[%c0_48, %c0_49] : memref<8x128xf32, #tpu.memory_space<vmem>>, vector<8x128xf32>
    tpu.vector_store %arg27[%c0_48, %c0_49], %44 {strides = array<i32>} : memref<8x128xf32, #tpu.memory_space<vmem>>, vector<8x128xf32>,
    %c2_i32 = arith.constant 2 : i32
    %74 = arith.cmpi eq, %arg0, %c2_i32 : i32
    %75 = arith.extui %74 : i1 to i32
    %c0_i32_50 = arith.constant 0 : i32
    %76 = arith.cmpi ne, %75, %c0_i32_50 : i32
    scf.if %76 {
      %77 = tpu.iota {dimensions = array<i32: 0>} : vector<2x8xi32>
      %c0_51 = arith.constant 0 : index
      %c0_52 = arith.constant 0 : index
      %78 = vector.load %arg5[%c0_51, %c0_52] : memref<1x8xi32, #tpu.memory_space<vmem>>, vector<1x8xi32>
      %79 = vector.broadcast %78 : vector<1x8xi32> to vector<2x8xi32>
      %80 = arith.cmpi eq, %77, %79 : vector<2x8xi32>
      %81 = arith.extui %80 : vector<2x8xi1> to vector<2x8xi32>
      %82 = arith.sitofp %81 : vector<2x8xi32> to vector<2x8xf32>
      %83 = arith.truncf %82 : vector<2x8xf32> to vector<2x8xbf16>
      %84 = tpu.iota {dimensions = array<i32: 0>} : vector<2x8xi32>
      %c0_53 = arith.constant 0 : index
      %c0_54 = arith.constant 0 : index
      %85 = vector.load %arg6[%c0_53, %c0_54] : memref<1x8xi32, #tpu.memory_space<vmem>>, vector<1x8xi32>
      %86 = vector.broadcast %85 : vector<1x8xi32> to vector<2x8xi32>
      %87 = arith.cmpi eq, %84, %86 : vector<2x8xi32>
      %88 = arith.extui %87 : vector<2x8xi1> to vector<2x8xi32>
      %89 = arith.sitofp %88 : vector<2x8xi32> to vector<2x8xf32>
      %90 = arith.truncf %89 : vector<2x8xf32> to vector<2x8xbf16>
      %91 = arith.truncf %71 : vector<8x128xf32> to vector<8x128xbf16>
      %cst_55 = arith.constant dense<0.000000e+00> : vector<2x128xf32>
      %92 = tpu.matmul %83, %91, %cst_55 {dimension_numbers = #tpu.dot_dimension_numbers<[1], [0], [0], [1], [0, 0, 1, 1], [], []>} : vector<2x8xbf16>, vector<8x128xbf16>, vector<2x128xf32> -> vector<2x128xf32>
      %c0_56 = arith.constant 0 : index
      %c0_57 = arith.constant 0 : index
      %93 = vector.load %arg9[%c0_56, %c0_57] : memref<2x1xf32, #tpu.memory_space<vmem>>, vector<2x1xf32>
      %94 = vector.broadcast %93 : vector<2x1xf32> to vector<2x128xf32>
      %95 = arith.mulf %92, %94 : vector<2x128xf32>
      %96 = arith.truncf %44 : vector<8x128xf32> to vector<8x128xbf16>
      %cst_58 = arith.constant dense<0.000000e+00> : vector<2x128xf32>
      %97 = tpu.matmul %90, %96, %cst_58 {dimension_numbers = #tpu.dot_dimension_numbers<[1], [0], [0], [1], [0, 0, 1, 1], [], []>} : vector<2x8xbf16>, vector<8x128xbf16>, vector<2x128xf32> -> vector<2x128xf32>
      %c0_59 = arith.constant 0 : index
      %c0_60 = arith.constant 0 : index
      %98 = vector.load %arg10[%c0_59, %c0_60] : memref<2x1xf32, #tpu.memory_space<vmem>>, vector<2x1xf32>
      %99 = vector.broadcast %98 : vector<2x1xf32> to vector<2x128xf32>
      %100 = arith.mulf %97, %99 : vector<2x128xf32>
      %c0_61 = arith.constant 0 : index
      %c0_62 = arith.constant 0 : index
      %101 = vector.load %arg19[%c0_61, %c0_62] : memref<128x128xbf16, #tpu.memory_space<vmem>>, vector<128x128xbf16>
      %102 = arith.truncf %95 : vector<2x128xf32> to vector<2x128xbf16>
      %cst_63 = arith.constant dense<0.000000e+00> : vector<2x128xf32>
      %103 = tpu.matmul %102, %101, %cst_63 {dimension_numbers = #tpu.dot_dimension_numbers<[1], [0], [0], [1], [0, 0, 1, 1], [], []>} : vector<2x128xbf16>, vector<128x128xbf16>, vector<2x128xf32> -> vector<2x128xf32>
      %c0_64 = arith.constant 0 : index
      %c0_65 = arith.constant 0 : index
      %104 = vector.load %arg20[%c0_64, %c0_65] : memref<128x128xbf16, #tpu.memory_space<vmem>>, vector<128x128xbf16>
      %105 = arith.truncf %100 : vector<2x128xf32> to vector<2x128xbf16>
      %cst_66 = arith.constant dense<0.000000e+00> : vector<2x128xf32>
      %106 = tpu.matmul %105, %104, %cst_66 {dimension_numbers = #tpu.dot_dimension_numbers<[1], [0], [0], [1], [0, 0, 1, 1], [], []>} : vector<2x128xbf16>, vector<128x128xbf16>, vector<2x128xf32> -> vector<2x128xf32>
      %107 = arith.addf %103, %106 : vector<2x128xf32>
      %c0_67 = arith.constant 0 : index
      %c0_68 = arith.constant 0 : index
      %108 = vector.load %arg21[%c0_67, %c0_68] : memref<1x128xf32, #tpu.memory_space<vmem>>, vector<1x128xf32>
      %109 = vector.broadcast %108 : vector<1x128xf32> to vector<2x128xf32>
      %110 = arith.addf %107, %109 : vector<2x128xf32>
      %c0_69 = arith.constant 0 : index
      %c0_70 = arith.constant 0 : index
      %111 = vector.load %arg22[%c0_69, %c0_70] : memref<2x128xf32, #tpu.memory_space<vmem>>, vector<2x128xf32>
      tpu.vector_store %arg22[%c0_69, %c0_70], %110 {strides = array<i32>} : memref<2x128xf32, #tpu.memory_space<vmem>>, vector<2x128xf32>,
      %112 = arith.truncf %71 : vector<8x128xf32> to vector<8x128xbf16>
      %cst_71 = arith.constant dense<0.000000e+00> : vector<16x128xf32>
      %113 = tpu.matmul %5, %112, %cst_71 {dimension_numbers = #tpu.dot_dimension_numbers<[1], [0], [0], [1], [0, 0, 1, 1], [], []>} : vector<16x8xbf16>, vector<8x128xbf16>, vector<16x128xf32> -> vector<16x128xf32>
      %114 = vector.extract_strided_slice %113 {offsets = [0, 0], sizes = [8, 128], strides = [1, 1]} : vector<16x128xf32> to vector<8x128xf32>
      %115 = vector.extract_strided_slice %113 {offsets = [8, 0], sizes = [8, 128], strides = [1, 1]} : vector<16x128xf32> to vector<8x128xf32>
      %116 = tpu.concatenate %114, %44, %115 in 1 : vector<8x128xf32>, vector<8x128xf32>, vector<8x128xf32> -> vector<8x384xf32>
      %117 = tpu.iota {dimensions = array<i32: 0>} : vector<16x8xi32>
      %c0_72 = arith.constant 0 : index
      %c0_73 = arith.constant 0 : index
      %118 = vector.load %arg7[%c0_72, %c0_73] : memref<1x8xi32, #tpu.memory_space<vmem>>, vector<1x8xi32>
      %119 = vector.broadcast %118 : vector<1x8xi32> to vector<16x8xi32>
      %120 = arith.cmpi eq, %117, %119 : vector<16x8xi32>
      %121 = arith.extui %120 : vector<16x8xi1> to vector<16x8xi32>
      %122 = arith.sitofp %121 : vector<16x8xi32> to vector<16x8xf32>
      %123 = arith.truncf %122 : vector<16x8xf32> to vector<16x8xbf16>
      %124 = arith.truncf %116 : vector<8x384xf32> to vector<8x384xbf16>
      %cst_74 = arith.constant dense<0.000000e+00> : vector<16x384xf32>
      %125 = tpu.matmul %123, %124, %cst_74 {dimension_numbers = #tpu.dot_dimension_numbers<[1], [0], [0], [1], [0, 0, 1, 1], [], []>} : vector<16x8xbf16>, vector<8x384xbf16>, vector<16x384xf32> -> vector<16x384xf32>
      %c0_75 = arith.constant 0 : index
      %c0_76 = arith.constant 0 : index
      %126 = vector.load %arg23[%c0_75, %c0_76] : memref<16x384xf32, #tpu.memory_space<vmem>>, vector<16x384xf32>
      tpu.vector_store %arg23[%c0_75, %c0_76], %125 {strides = array<i32>} : memref<16x384xf32, #tpu.memory_space<vmem>>, vector<16x384xf32>,
    } else {
    }
    return
  }
  func.func @transform_0(%arg0: i32) -> (i32, i32) {
    %c0_i32 = arith.constant 0 : i32
    %c0_i32_0 = arith.constant 0 : i32
    %c0_i32_1 = arith.constant 0 : i32
    return %c0_i32, %c0_i32_0 : i32, i32
  }
  func.func @transform_1(%arg0: i32) -> (i32, i32) {
    %c0_i32 = arith.constant 0 : i32
    %c0_i32_0 = arith.constant 0 : i32
    %c0_i32_1 = arith.constant 0 : i32
    return %c0_i32, %c0_i32_0 : i32, i32
  }
  func.func @transform_2(%arg0: i32) -> (i32, i32) {
    %c0_i32 = arith.constant 0 : i32
    %c0_i32_0 = arith.constant 0 : i32
    %c0_i32_1 = arith.constant 0 : i32
    return %c0_i32, %c0_i32_0 : i32, i32
  }
  func.func @transform_3(%arg0: i32) -> (i32, i32) {
    %c0_i32 = arith.constant 0 : i32
    %c0_i32_0 = arith.constant 0 : i32
    %c0_i32_1 = arith.constant 0 : i32
    return %c0_i32, %c0_i32_0 : i32, i32
  }
  func.func @transform_4(%arg0: i32) -> (i32, i32) {
    %c0_i32 = arith.constant 0 : i32
    %c0_i32_0 = arith.constant 0 : i32
    %c0_i32_1 = arith.constant 0 : i32
    return %c0_i32, %c0_i32_0 : i32, i32
  }
  func.func @transform_5(%arg0: i32) -> (i32, i32) {
    %c0_i32 = arith.constant 0 : i32
    %c0_i32_0 = arith.constant 0 : i32
    %c0_i32_1 = arith.constant 0 : i32
    return %c0_i32, %c0_i32_0 : i32, i32
  }
  func.func @transform_6(%arg0: i32) -> (i32, i32) {
    %c0_i32 = arith.constant 0 : i32
    %c0_i32_0 = arith.constant 0 : i32
    %c0_i32_1 = arith.constant 0 : i32
    return %c0_i32, %c0_i32_0 : i32, i32
  }
  func.func @transform_7(%arg0: i32) -> (i32, i32) {
    %c0_i32 = arith.constant 0 : i32
    %c0_i32_0 = arith.constant 0 : i32
    %c0_i32_1 = arith.constant 0 : i32
    return %c0_i32, %c0_i32_0 : i32, i32
  }
  func.func @transform_8(%arg0: i32) -> (i32, i32) {
    %c0_i32 = arith.constant 0 : i32
    %c0_i32_0 = arith.constant 0 : i32
    %c0_i32_1 = arith.constant 0 : i32
    return %c0_i32, %c0_i32_0 : i32, i32
  }
  func.func @transform_9(%arg0: i32) -> (i32, i32) {
    %c0_i32 = arith.constant 0 : i32
    %c0_i32_0 = arith.constant 0 : i32
    %c0_i32_1 = arith.constant 0 : i32
    return %c0_i32, %c0_i32_0 : i32, i32
  }
  func.func @transform_10(%arg0: i32) -> (i32, i32, i32, i32) {
    %c0_i32 = arith.constant 0 : i32
    %c0_i32_0 = arith.constant 0 : i32
    %c0_i32_1 = arith.constant 0 : i32
    %c0_i32_2 = arith.constant 0 : i32
    return %arg0, %c0_i32, %c0_i32_0, %c0_i32_1 : i32, i32, i32, i32
  }
  func.func @transform_11(%arg0: i32) -> (i32, i32, i32) {
    %c0_i32 = arith.constant 0 : i32
    %c0_i32_0 = arith.constant 0 : i32
    %c0_i32_1 = arith.constant 0 : i32
    return %arg0, %c0_i32, %c0_i32_0 : i32, i32, i32
  }
  func.func @transform_12(%arg0: i32) -> (i32, i32, i32) {
    %c0_i32 = arith.constant 0 : i32
    %c0_i32_0 = arith.constant 0 : i32
    %c0_i32_1 = arith.constant 0 : i32
    return %arg0, %c0_i32, %c0_i32_0 : i32, i32, i32
  }
  func.func @transform_13(%arg0: i32) -> (i32, i32, i32) {
    %c0_i32 = arith.constant 0 : i32
    %c0_i32_0 = arith.constant 0 : i32
    %c0_i32_1 = arith.constant 0 : i32
    return %arg0, %c0_i32, %c0_i32_0 : i32, i32, i32
  }
  func.func @transform_14(%arg0: i32) -> (i32, i32, i32) {
    %c0_i32 = arith.constant 0 : i32
    %c0_i32_0 = arith.constant 0 : i32
    %c0_i32_1 = arith.constant 0 : i32
    return %arg0, %c0_i32, %c0_i32_0 : i32, i32, i32
  }
  func.func @transform_15(%arg0: i32) -> (i32, i32, i32) {
    %c0_i32 = arith.constant 0 : i32
    %c0_i32_0 = arith.constant 0 : i32
    %c0_i32_1 = arith.constant 0 : i32
    return %arg0, %c0_i32, %c0_i32_0 : i32, i32, i32
  }
  func.func @transform_16(%arg0: i32) -> (i32, i32, i32) {
    %c0_i32 = arith.constant 0 : i32
    %c0_i32_0 = arith.constant 0 : i32
    %c0_i32_1 = arith.constant 0 : i32
    return %arg0, %c0_i32, %c0_i32_0 : i32, i32, i32
  }
  func.func @transform_17(%arg0: i32) -> (i32, i32, i32) {
    %c0_i32 = arith.constant 0 : i32
    %c0_i32_0 = arith.constant 0 : i32
    %c0_i32_1 = arith.constant 0 : i32
    return %arg0, %c0_i32, %c0_i32_0 : i32, i32, i32
  }
  func.func @transform_18(%arg0: i32) -> (i32, i32) {
    %c0_i32 = arith.constant 0 : i32
    %c0_i32_0 = arith.constant 0 : i32
    %c0_i32_1 = arith.constant 0 : i32
    return %c0_i32, %c0_i32_0 : i32, i32
  }
  func.func @transform_19(%arg0: i32) -> (i32, i32) {
    %c0_i32 = arith.constant 0 : i32
    %c0_i32_0 = arith.constant 0 : i32
    %c0_i32_1 = arith.constant 0 : i32
    return %c0_i32, %c0_i32_0 : i32, i32
  }
  func.func @transform_20(%arg0: i32) -> (i32, i32) {
    %c0_i32 = arith.constant 0 : i32
    %c0_i32_0 = arith.constant 0 : i32
    %c0_i32_1 = arith.constant 0 : i32
    return %c0_i32, %c0_i32_0 : i32, i32
  }
  func.func @transform_21(%arg0: i32) -> (i32, i32) {
    %c0_i32 = arith.constant 0 : i32
    %c0_i32_0 = arith.constant 0 : i32
    %c0_i32_1 = arith.constant 0 : i32
    return %c0_i32, %c0_i32_0 : i32, i32
  }
  func.func @transform_22(%arg0: i32) -> (i32, i32) {
    %c0_i32 = arith.constant 0 : i32
    %c0_i32_0 = arith.constant 0 : i32
    %c0_i32_1 = arith.constant 0 : i32
    return %c0_i32, %c0_i32_0 : i32, i32
  }
}

</mosaic_0001>

<llo_original>
// kernel: cgip_forward.1
$region0: #{cgip_forward.1}
  #allocation0 [shape = 'u32[]', space=smem, size = 0x4, offset = 0x4, fixed_abs, tag = 'smem constant byte address 0x4 - core index']
  #allocation1 [shape = 'u32[72,128]{1,0:T(1,128)}', space=vmem, size = 0x9000, scoped, tag = 'internal scratch']
  #allocation2 [shape = 'bf16[16,8]{1,0:T(8,128)(2,1)}', space=vmem, size = 0x1000, scoped, tag = 'scratch operand']
  #allocation3 [shape = 'bf16[8,16]{1,0:T(8,128)(2,1)}', space=vmem, size = 0x800, scoped, tag = 'scratch operand']
  #allocation4 [shape = 'f32[8,128]{1,0:T(8,128)}', space=vmem, size = 0x1000, scoped, tag = 'scratch operand']
  #allocation5 [shape = 'f32[8,128]{1,0:T(8,128)}', space=vmem, size = 0x1000, scoped, tag = 'scratch operand']
  %s0 = inlined_call_operand.vmem [shape: f32[8,128], index: 0, kind: input, shape index: {}]
  %s1 = inlined_call_operand.vmem [shape: f32[8,128], index: 1, kind: input, shape index: {}]
  %s2 = inlined_call_operand.vmem [shape: s32[16,1], index: 2, kind: input, shape index: {}]
  %s3 = inlined_call_operand.vmem [shape: s32[1,16], index: 3, kind: input, shape index: {}]
  %s4 = inlined_call_operand.vmem [shape: s32[1,8], index: 4, kind: input, shape index: {}]
  %s5 = inlined_call_operand.vmem [shape: s32[1,8], index: 5, kind: input, shape index: {}]
  %s6 = inlined_call_operand.vmem [shape: s32[1,8], index: 6, kind: input, shape index: {}]
  %s7 = inlined_call_operand.vmem [shape: f32[8,1], index: 7, kind: input, shape index: {}]
  %s8 = inlined_call_operand.vmem [shape: f32[2,1], index: 8, kind: input, shape index: {}]
  %s9 = inlined_call_operand.vmem [shape: f32[2,1], index: 9, kind: input, shape index: {}]
  %s10 = inlined_call_operand.vmem [shape: bf16[3,3,128,128], index: 10, kind: input, shape index: {}]
  %s11 = inlined_call_operand.vmem [shape: f32[3,1,128], index: 11, kind: input, shape index: {}]
  %s12 = inlined_call_operand.vmem [shape: bf16[3,128,384], index: 12, kind: input, shape index: {}]
  %s13 = inlined_call_operand.vmem [shape: f32[3,1,384], index: 13, kind: input, shape index: {}]
  %s14 = inlined_call_operand.vmem [shape: bf16[3,128,128], index: 14, kind: input, shape index: {}]
  %s15 = inlined_call_operand.vmem [shape: f32[3,1,128], index: 15, kind: input, shape index: {}]
  %s16 = inlined_call_operand.vmem [shape: bf16[3,128,128], index: 16, kind: input, shape index: {}]
  %s17 = inlined_call_operand.vmem [shape: f32[3,1,128], index: 17, kind: input, shape index: {}]
  %s18 = inlined_call_operand.vmem [shape: bf16[128,128], index: 18, kind: input, shape index: {}]
  %s19 = inlined_call_operand.vmem [shape: bf16[128,128], index: 19, kind: input, shape index: {}]
  %s20 = inlined_call_operand.vmem [shape: f32[1,128], index: 20, kind: input, shape index: {}]
  %s21 = inlined_call_operand.hbm [shape: f32[2,128], index: 21, kind: output, shape index: {0}]
  %s22 = inlined_call_operand.vmem [shape: f32[16,384], index: 22, kind: output, shape index: {1}]
  %23 = xla_tuple %s21, %s22
  %s24 = sld [smem:[#allocation0]]
  $region133: #{cgip_forward.1} parent=0
    _
  %s26 = ssub.s32 1, %s24
  %s27 = scalar_select 0, %s26, %s24
  $region1: #{cgip_forward.1} parent=0
    #allocation6 [shape = 'u8[1024]{0}', space=vmem, size = 0x400, scoped, tag = 'output window, operand 0, single buffered']
    #allocation7 [shape = 's32[2]{0}', space=sflag, size = 0x8, scoped, tag = 'scoped memory for cgip_forward.1']
    %28 = vsyncpa [#allocation7], 0
    loop: start=0, step=1, limit=5
    $region2: #{cgip_forward.1} parent=1 // loop_pre_header
      _
    $region3: #{cgip_forward.1} parent=1 // loop_header
      %s30 = sphi 0, %s34
      %p31 = scmp.ge.s32.totalorder %s30, 5
      %s38 = sphi 0, %s38
      %s40 = sphi 0, %s38
      %s41 = sphi 0, %s40
      %s55 = sphi 0, %s41
      %s59 = sphi 0, %s59
      %s61 = sphi 0, %s59
      %s62 = sphi 0, %s61
      %s76 = sphi 0, %s62
      %s80 = sphi 0, %s80
      %s82 = sphi 0, %s80
      %s83 = sphi 0, %s82
      %s97 = sphi 0, %s83
      %s101 = sphi 0, %s101
      %s103 = sphi 0, %s101
      %s104 = sphi 0, %s103
      %s118 = sphi 0, %s104
      %s122 = sphi 0, %s122
      %s124 = sphi 0, %s122
      %s125 = sphi 0, %s124
      %s139 = sphi 0, %s125
      %s143 = sphi 0, %s143
      %s145 = sphi 0, %s143
      %s146 = sphi 0, %s145
      %s160 = sphi 0, %s146
      %s164 = sphi 0, %s164
      %s166 = sphi 0, %s164
      %s167 = sphi 0, %s166
      %s181 = sphi 0, %s167
      %s185 = sphi 0, %s185
      %s187 = sphi 0, %s185
      %s188 = sphi 0, %s187
      %s202 = sphi 0, %s188
      %s206 = sphi 0, %s206
      %s208 = sphi 0, %s206
      %s209 = sphi 0, %s208
      %s223 = sphi 0, %s209
      %s227 = sphi 0, %s227
      %s229 = sphi 0, %s227
      %s230 = sphi 0, %s229
      %s244 = sphi 0, %s230
      %s250 = sphi 0, %s252
      %s253 = sphi 0, %s250
      %s254 = sphi 0, %s253
      %s270 = sphi 0, %s254
      %s276 = sphi 0, %s278
      %s279 = sphi 0, %s276
      %s280 = sphi 0, %s279
      %s296 = sphi 0, %s280
      %s302 = sphi 0, %s304
      %s305 = sphi 0, %s302
      %s306 = sphi 0, %s305
      %s322 = sphi 0, %s306
      %s328 = sphi 0, %s330
      %s331 = sphi 0, %s328
      %s332 = sphi 0, %s331
      %s348 = sphi 0, %s332
      %s354 = sphi 0, %s356
      %s357 = sphi 0, %s354
      %s358 = sphi 0, %s357
      %s374 = sphi 0, %s358
      %s380 = sphi 0, %s382
      %s383 = sphi 0, %s380
      %s384 = sphi 0, %s383
      %s400 = sphi 0, %s384
      %s406 = sphi 0, %s408
      %s409 = sphi 0, %s406
      %s410 = sphi 0, %s409
      %s426 = sphi 0, %s410
      %s432 = sphi 0, %s434
      %s435 = sphi 0, %s432
      %s436 = sphi 0, %s435
      %s452 = sphi 0, %s436
      %s456 = sphi 0, %s456
      %s458 = sphi 0, %s456
      %s459 = sphi 0, %s458
      %s473 = sphi 0, %s459
      %s477 = sphi 0, %s477
      %s479 = sphi 0, %s477
      %s480 = sphi 0, %s479
      %s494 = sphi 0, %s480
      %s498 = sphi 0, %s498
      %s500 = sphi 0, %s498
      %s501 = sphi 0, %s500
      %s515 = sphi 0, %s501
      %s519 = sphi 0, %s519
      %s521 = sphi 0, %s519
      %s522 = sphi 0, %s521
      %s536 = sphi 0, %s522
      %s540 = sphi 0, %s540
      %s542 = sphi 0, %s540
      %s543 = sphi 0, %s542
      %s557 = sphi 0, %s543
    $region4: #{cgip_forward.1} parent=1 // loop_header_branch
      %33 = sbr.rel (%p31) target = $region8
    $region5: #{cgip_forward.1} parent=1 // loop_body
      %s35 = ssub.s32 %s30, 1
      %s36 = ssub.s32 %s30, 2
      %s37 = sadd.s32 %s30, 1
      %s39 = sadd.s32 %s38, 1
      %p42 = scmp.eq.s32.totalorder %s30, 2
      %p43 = scmp.ne.s32.totalorder %s38, %s40
      %p44 = scmp.eq.s32.totalorder %s30, 0
      %p45 = por %p43, %p44
      %p46 = scmp.ne.s32.totalorder %s38, %s40
      %p47 = scmp.eq.s32.totalorder %s35, 2
      %p48 = por %p46, %p47
      %p49 = scmp.ne.s32.totalorder %s40, %s41
      %p50 = scmp.eq.s32.totalorder %s35, 0
      %p51 = por %p49, %p50
      %p52 = scmp.ne.s32.totalorder %s40, %s41
      %p53 = scmp.eq.s32.totalorder %s36, 2
      %p54 = por %p52, %p53
      %p56 = scmp.ne.s32.totalorder %s41, %s55
      %p57 = scmp.eq.s32.totalorder %s36, 0
      %p58 = por %p56, %p57
      %s60 = sadd.s32 %s59, 1
      %p63 = scmp.eq.s32.totalorder %s30, 2
      %p64 = scmp.ne.s32.totalorder %s59, %s61
      %p65 = scmp.eq.s32.totalorder %s30, 0
      %p66 = por %p64, %p65
      %p67 = scmp.ne.s32.totalorder %s59, %s61
      %p68 = scmp.eq.s32.totalorder %s35, 2
      %p69 = por %p67, %p68
      %p70 = scmp.ne.s32.totalorder %s61, %s62
      %p71 = scmp.eq.s32.totalorder %s35, 0
      %p72 = por %p70, %p71
      %p73 = scmp.ne.s32.totalorder %s61, %s62
      %p74 = scmp.eq.s32.totalorder %s36, 2
      %p75 = por %p73, %p74
      %p77 = scmp.ne.s32.totalorder %s62, %s76
      %p78 = scmp.eq.s32.totalorder %s36, 0
      %p79 = por %p77, %p78
      %s81 = sadd.s32 %s80, 1
      %p84 = scmp.eq.s32.totalorder %s30, 2
      %p85 = scmp.ne.s32.totalorder %s80, %s82
      %p86 = scmp.eq.s32.totalorder %s30, 0
      %p87 = por %p85, %p86
      %p88 = scmp.ne.s32.totalorder %s80, %s82
      %p89 = scmp.eq.s32.totalorder %s35, 2
      %p90 = por %p88, %p89
      %p91 = scmp.ne.s32.totalorder %s82, %s83
      %p92 = scmp.eq.s32.totalorder %s35, 0
      %p93 = por %p91, %p92
      %p94 = scmp.ne.s32.totalorder %s82, %s83
      %p95 = scmp.eq.s32.totalorder %s36, 2
      %p96 = por %p94, %p95
      %p98 = scmp.ne.s32.totalorder %s83, %s97
      %p99 = scmp.eq.s32.totalorder %s36, 0
      %p100 = por %p98, %p99
      %s102 = sadd.s32 %s101, 1
      %p105 = scmp.eq.s32.totalorder %s30, 2
      %p106 = scmp.ne.s32.totalorder %s101, %s103
      %p107 = scmp.eq.s32.totalorder %s30, 0
      %p108 = por %p106, %p107
      %p109 = scmp.ne.s32.totalorder %s101, %s103
      %p110 = scmp.eq.s32.totalorder %s35, 2
      %p111 = por %p109, %p110
      %p112 = scmp.ne.s32.totalorder %s103, %s104
      %p113 = scmp.eq.s32.totalorder %s35, 0
      %p114 = por %p112, %p113
      %p115 = scmp.ne.s32.totalorder %s103, %s104
      %p116 = scmp.eq.s32.totalorder %s36, 2
      %p117 = por %p115, %p116
      %p119 = scmp.ne.s32.totalorder %s104, %s118
      %p120 = scmp.eq.s32.totalorder %s36, 0
      %p121 = por %p119, %p120
      %s123 = sadd.s32 %s122, 1
      %p126 = scmp.eq.s32.totalorder %s30, 2
      %p127 = scmp.ne.s32.totalorder %s122, %s124
      %p128 = scmp.eq.s32.totalorder %s30, 0
      %p129 = por %p127, %p128
      %p130 = scmp.ne.s32.totalorder %s122, %s124
      %p131 = scmp.eq.s32.totalorder %s35, 2
      %p132 = por %p130, %p131
      %p133 = scmp.ne.s32.totalorder %s124, %s125
      %p134 = scmp.eq.s32.totalorder %s35, 0
      %p135 = por %p133, %p134
      %p136 = scmp.ne.s32.totalorder %s124, %s125
      %p137 = scmp.eq.s32.totalorder %s36, 2
      %p138 = por %p136, %p137
      %p140 = scmp.ne.s32.totalorder %s125, %s139
      %p141 = scmp.eq.s32.totalorder %s36, 0
      %p142 = por %p140, %p141
      %s144 = sadd.s32 %s143, 1
      %p147 = scmp.eq.s32.totalorder %s30, 2
      %p148 = scmp.ne.s32.totalorder %s143, %s145
      %p149 = scmp.eq.s32.totalorder %s30, 0
      %p150 = por %p148, %p149
      %p151 = scmp.ne.s32.totalorder %s143, %s145
      %p152 = scmp.eq.s32.totalorder %s35, 2
      %p153 = por %p151, %p152
      %p154 = scmp.ne.s32.totalorder %s145, %s146
      %p155 = scmp.eq.s32.totalorder %s35, 0
      %p156 = por %p154, %p155
      %p157 = scmp.ne.s32.totalorder %s145, %s146
      %p158 = scmp.eq.s32.totalorder %s36, 2
      %p159 = por %p157, %p158
      %p161 = scmp.ne.s32.totalorder %s146, %s160
      %p162 = scmp.eq.s32.totalorder %s36, 0
      %p163 = por %p161, %p162
      %s165 = sadd.s32 %s164, 1
      %p168 = scmp.eq.s32.totalorder %s30, 2
      %p169 = scmp.ne.s32.totalorder %s164, %s166
      %p170 = scmp.eq.s32.totalorder %s30, 0
      %p171 = por %p169, %p170
      %p172 = scmp.ne.s32.totalorder %s164, %s166
      %p173 = scmp.eq.s32.totalorder %s35, 2
      %p174 = por %p172, %p173
      %p175 = scmp.ne.s32.totalorder %s166, %s167
      %p176 = scmp.eq.s32.totalorder %s35, 0
      %p177 = por %p175, %p176
      %p178 = scmp.ne.s32.totalorder %s166, %s167
      %p179 = scmp.eq.s32.totalorder %s36, 2
      %p180 = por %p178, %p179
      %p182 = scmp.ne.s32.totalorder %s167, %s181
      %p183 = scmp.eq.s32.totalorder %s36, 0
      %p184 = por %p182, %p183
      %s186 = sadd.s32 %s185, 1
      %p189 = scmp.eq.s32.totalorder %s30, 2
      %p190 = scmp.ne.s32.totalorder %s185, %s187
      %p191 = scmp.eq.s32.totalorder %s30, 0
      %p192 = por %p190, %p191
      %p193 = scmp.ne.s32.totalorder %s185, %s187
      %p194 = scmp.eq.s32.totalorder %s35, 2
      %p195 = por %p193, %p194
      %p196 = scmp.ne.s32.totalorder %s187, %s188
      %p197 = scmp.eq.s32.totalorder %s35, 0
      %p198 = por %p196, %p197
      %p199 = scmp.ne.s32.totalorder %s187, %s188
      %p200 = scmp.eq.s32.totalorder %s36, 2
      %p201 = por %p199, %p200
      %p203 = scmp.ne.s32.totalorder %s188, %s202
      %p204 = scmp.eq.s32.totalorder %s36, 0
      %p205 = por %p203, %p204
      %s207 = sadd.s32 %s206, 1
      %p210 = scmp.eq.s32.totalorder %s30, 2
      %p211 = scmp.ne.s32.totalorder %s206, %s208
      %p212 = scmp.eq.s32.totalorder %s30, 0
      %p213 = por %p211, %p212
      %p214 = scmp.ne.s32.totalorder %s206, %s208
      %p215 = scmp.eq.s32.totalorder %s35, 2
      %p216 = por %p214, %p215
      %p217 = scmp.ne.s32.totalorder %s208, %s209
      %p218 = scmp.eq.s32.totalorder %s35, 0
      %p219 = por %p217, %p218
      %p220 = scmp.ne.s32.totalorder %s208, %s209
      %p221 = scmp.eq.s32.totalorder %s36, 2
      %p222 = por %p220, %p221
      %p224 = scmp.ne.s32.totalorder %s209, %s223
      %p225 = scmp.eq.s32.totalorder %s36, 0
      %p226 = por %p224, %p225
      %s228 = sadd.s32 %s227, 1
      %p231 = scmp.eq.s32.totalorder %s30, 2
      %p232 = scmp.ne.s32.totalorder %s227, %s229
      %p233 = scmp.eq.s32.totalorder %s30, 0
      %p234 = por %p232, %p233
      %p235 = scmp.ne.s32.totalorder %s227, %s229
      %p236 = scmp.eq.s32.totalorder %s35, 2
      %p237 = por %p235, %p236
      %p238 = scmp.ne.s32.totalorder %s229, %s230
      %p239 = scmp.eq.s32.totalorder %s35, 0
      %p240 = por %p238, %p239
      %p241 = scmp.ne.s32.totalorder %s229, %s230
      %p242 = scmp.eq.s32.totalorder %s36, 2
      %p243 = por %p241, %p242
      %p245 = scmp.ne.s32.totalorder %s230, %s244
      %p246 = scmp.eq.s32.totalorder %s36, 0
      %p247 = por %p245, %p246
      %s248 = ssub.s32 %s30, %s37
      %p249 = scmp.eq.s32.totalorder %s248, 0
      %s251 = sadd.s32 %s250, 1
      %s252 = scalar_select %p249, %s250, %s251
      %p255 = pneg %p249
      %p256 = scmp.eq.s32.totalorder %s30, 2
      %p257 = por %p255, %p256
      %p258 = scmp.ne.s32.totalorder %s250, %s253
      %p259 = scmp.eq.s32.totalorder %s30, 0
      %p260 = por %p258, %p259
      %p261 = scmp.ne.s32.totalorder %s250, %s253
      %p262 = scmp.eq.s32.totalorder %s35, 2
      %p263 = por %p261, %p262
      %p264 = scmp.ne.s32.totalorder %s253, %s254
      %p265 = scmp.eq.s32.totalorder %s35, 0
      %p266 = por %p264, %p265
      %p267 = scmp.ne.s32.totalorder %s253, %s254
      %p268 = scmp.eq.s32.totalorder %s36, 2
      %p269 = por %p267, %p268
      %p271 = scmp.ne.s32.totalorder %s254, %s270
      %p272 = scmp.eq.s32.totalorder %s36, 0
      %p273 = por %p271, %p272
      %s274 = ssub.s32 %s30, %s37
      %p275 = scmp.eq.s32.totalorder %s274, 0
      %s277 = sadd.s32 %s276, 1
      %s278 = scalar_select %p275, %s276, %s277
      %p281 = pneg %p275
      %p282 = scmp.eq.s32.totalorder %s30, 2
      %p283 = por %p281, %p282
      %p284 = scmp.ne.s32.totalorder %s276, %s279
      %p285 = scmp.eq.s32.totalorder %s30, 0
      %p286 = por %p284, %p285
      %p287 = scmp.ne.s32.totalorder %s276, %s279
      %p288 = scmp.eq.s32.totalorder %s35, 2
      %p289 = por %p287, %p288
      %p290 = scmp.ne.s32.totalorder %s279, %s280
      %p291 = scmp.eq.s32.totalorder %s35, 0
      %p292 = por %p290, %p291
      %p293 = scmp.ne.s32.totalorder %s279, %s280
      %p294 = scmp.eq.s32.totalorder %s36, 2
      %p295 = por %p293, %p294
      %p297 = scmp.ne.s32.totalorder %s280, %s296
      %p298 = scmp.eq.s32.totalorder %s36, 0
      %p299 = por %p297, %p298
      %s300 = ssub.s32 %s30, %s37
      %p301 = scmp.eq.s32.totalorder %s300, 0
      %s303 = sadd.s32 %s302, 1
      %s304 = scalar_select %p301, %s302, %s303
      %p307 = pneg %p301
      %p308 = scmp.eq.s32.totalorder %s30, 2
      %p309 = por %p307, %p308
      %p310 = scmp.ne.s32.totalorder %s302, %s305
      %p311 = scmp.eq.s32.totalorder %s30, 0
      %p312 = por %p310, %p311
      %p313 = scmp.ne.s32.totalorder %s302, %s305
      %p314 = scmp.eq.s32.totalorder %s35, 2
      %p315 = por %p313, %p314
      %p316 = scmp.ne.s32.totalorder %s305, %s306
      %p317 = scmp.eq.s32.totalorder %s35, 0
      %p318 = por %p316, %p317
      %p319 = scmp.ne.s32.totalorder %s305, %s306
      %p320 = scmp.eq.s32.totalorder %s36, 2
      %p321 = por %p319, %p320
      %p323 = scmp.ne.s32.totalorder %s306, %s322
      %p324 = scmp.eq.s32.totalorder %s36, 0
      %p325 = por %p323, %p324
      %s326 = ssub.s32 %s30, %s37
      %p327 = scmp.eq.s32.totalorder %s326, 0
      %s329 = sadd.s32 %s328, 1
      %s330 = scalar_select %p327, %s328, %s329
      %p333 = pneg %p327
      %p334 = scmp.eq.s32.totalorder %s30, 2
      %p335 = por %p333, %p334
      %p336 = scmp.ne.s32.totalorder %s328, %s331
      %p337 = scmp.eq.s32.totalorder %s30, 0
      %p338 = por %p336, %p337
      %p339 = scmp.ne.s32.totalorder %s328, %s331
      %p340 = scmp.eq.s32.totalorder %s35, 2
      %p341 = por %p339, %p340
      %p342 = scmp.ne.s32.totalorder %s331, %s332
      %p343 = scmp.eq.s32.totalorder %s35, 0
      %p344 = por %p342, %p343
      %p345 = scmp.ne.s32.totalorder %s331, %s332
      %p346 = scmp.eq.s32.totalorder %s36, 2
      %p347 = por %p345, %p346
      %p349 = scmp.ne.s32.totalorder %s332, %s348
      %p350 = scmp.eq.s32.totalorder %s36, 0
      %p351 = por %p349, %p350
      %s352 = ssub.s32 %s30, %s37
      %p353 = scmp.eq.s32.totalorder %s352, 0
      %s355 = sadd.s32 %s354, 1
      %s356 = scalar_select %p353, %s354, %s355
      %p359 = pneg %p353
      %p360 = scmp.eq.s32.totalorder %s30, 2
      %p361 = por %p359, %p360
      %p362 = scmp.ne.s32.totalorder %s354, %s357
      %p363 = scmp.eq.s32.totalorder %s30, 0
      %p364 = por %p362, %p363
      %p365 = scmp.ne.s32.totalorder %s354, %s357
      %p366 = scmp.eq.s32.totalorder %s35, 2
      %p367 = por %p365, %p366
      %p368 = scmp.ne.s32.totalorder %s357, %s358
      %p369 = scmp.eq.s32.totalorder %s35, 0
      %p370 = por %p368, %p369
      %p371 = scmp.ne.s32.totalorder %s357, %s358
      %p372 = scmp.eq.s32.totalorder %s36, 2
      %p373 = por %p371, %p372
      %p375 = scmp.ne.s32.totalorder %s358, %s374
      %p376 = scmp.eq.s32.totalorder %s36, 0
      %p377 = por %p375, %p376
      %s378 = ssub.s32 %s30, %s37
      %p379 = scmp.eq.s32.totalorder %s378, 0
      %s381 = sadd.s32 %s380, 1
      %s382 = scalar_select %p379, %s380, %s381
      %p385 = pneg %p379
      %p386 = scmp.eq.s32.totalorder %s30, 2
      %p387 = por %p385, %p386
      %p388 = scmp.ne.s32.totalorder %s380, %s383
      %p389 = scmp.eq.s32.totalorder %s30, 0
      %p390 = por %p388, %p389
      %p391 = scmp.ne.s32.totalorder %s380, %s383
      %p392 = scmp.eq.s32.totalorder %s35, 2
      %p393 = por %p391, %p392
      %p394 = scmp.ne.s32.totalorder %s383, %s384
      %p395 = scmp.eq.s32.totalorder %s35, 0
      %p396 = por %p394, %p395
      %p397 = scmp.ne.s32.totalorder %s383, %s384
      %p398 = scmp.eq.s32.totalorder %s36, 2
      %p399 = por %p397, %p398
      %p401 = scmp.ne.s32.totalorder %s384, %s400
      %p402 = scmp.eq.s32.totalorder %s36, 0
      %p403 = por %p401, %p402
      %s404 = ssub.s32 %s30, %s37
      %p405 = scmp.eq.s32.totalorder %s404, 0
      %s407 = sadd.s32 %s406, 1
      %s408 = scalar_select %p405, %s406, %s407
      %p411 = pneg %p405
      %p412 = scmp.eq.s32.totalorder %s30, 2
      %p413 = por %p411, %p412
      %p414 = scmp.ne.s32.totalorder %s406, %s409
      %p415 = scmp.eq.s32.totalorder %s30, 0
      %p416 = por %p414, %p415
      %p417 = scmp.ne.s32.totalorder %s406, %s409
      %p418 = scmp.eq.s32.totalorder %s35, 2
      %p419 = por %p417, %p418
      %p420 = scmp.ne.s32.totalorder %s409, %s410
      %p421 = scmp.eq.s32.totalorder %s35, 0
      %p422 = por %p420, %p421
      %p423 = scmp.ne.s32.totalorder %s409, %s410
      %p424 = scmp.eq.s32.totalorder %s36, 2
      %p425 = por %p423, %p424
      %p427 = scmp.ne.s32.totalorder %s410, %s426
      %p428 = scmp.eq.s32.totalorder %s36, 0
      %p429 = por %p427, %p428
      %s430 = ssub.s32 %s30, %s37
      %p431 = scmp.eq.s32.totalorder %s430, 0
      %s433 = sadd.s32 %s432, 1
      %s434 = scalar_select %p431, %s432, %s433
      %p437 = pneg %p431
      %p438 = scmp.eq.s32.totalorder %s30, 2
      %p439 = por %p437, %p438
      %p440 = scmp.ne.s32.totalorder %s432, %s435
      %p441 = scmp.eq.s32.totalorder %s30, 0
      %p442 = por %p440, %p441
      %p443 = scmp.ne.s32.totalorder %s432, %s435
      %p444 = scmp.eq.s32.totalorder %s35, 2
      %p445 = por %p443, %p444
      %p446 = scmp.ne.s32.totalorder %s435, %s436
      %p447 = scmp.eq.s32.totalorder %s35, 0
      %p448 = por %p446, %p447
      %p449 = scmp.ne.s32.totalorder %s435, %s436
      %p450 = scmp.eq.s32.totalorder %s36, 2
      %p451 = por %p449, %p450
      %p453 = scmp.ne.s32.totalorder %s436, %s452
      %p454 = scmp.eq.s32.totalorder %s36, 0
      %p455 = por %p453, %p454
      %s457 = sadd.s32 %s456, 1
      %p460 = scmp.eq.s32.totalorder %s30, 2
      %p461 = scmp.ne.s32.totalorder %s456, %s458
      %p462 = scmp.eq.s32.totalorder %s30, 0
      %p463 = por %p461, %p462
      %p464 = scmp.ne.s32.totalorder %s456, %s458
      %p465 = scmp.eq.s32.totalorder %s35, 2
      %p466 = por %p464, %p465
      %p467 = scmp.ne.s32.totalorder %s458, %s459
      %p468 = scmp.eq.s32.totalorder %s35, 0
      %p469 = por %p467, %p468
      %p470 = scmp.ne.s32.totalorder %s458, %s459
      %p471 = scmp.eq.s32.totalorder %s36, 2
      %p472 = por %p470, %p471
      %p474 = scmp.ne.s32.totalorder %s459, %s473
      %p475 = scmp.eq.s32.totalorder %s36, 0
      %p476 = por %p474, %p475
      %s478 = sadd.s32 %s477, 1
      %p481 = scmp.eq.s32.totalorder %s30, 2
      %p482 = scmp.ne.s32.totalorder %s477, %s479
      %p483 = scmp.eq.s32.totalorder %s30, 0
      %p484 = por %p482, %p483
      %p485 = scmp.ne.s32.totalorder %s477, %s479
      %p486 = scmp.eq.s32.totalorder %s35, 2
      %p487 = por %p485, %p486
      %p488 = scmp.ne.s32.totalorder %s479, %s480
      %p489 = scmp.eq.s32.totalorder %s35, 0
      %p490 = por %p488, %p489
      %p491 = scmp.ne.s32.totalorder %s479, %s480
      %p492 = scmp.eq.s32.totalorder %s36, 2
      %p493 = por %p491, %p492
      %p495 = scmp.ne.s32.totalorder %s480, %s494
      %p496 = scmp.eq.s32.totalorder %s36, 0
      %p497 = por %p495, %p496
      %s499 = sadd.s32 %s498, 1
      %p502 = scmp.eq.s32.totalorder %s30, 2
      %p503 = scmp.ne.s32.totalorder %s498, %s500
      %p504 = scmp.eq.s32.totalorder %s30, 0
      %p505 = por %p503, %p504
      %p506 = scmp.ne.s32.totalorder %s498, %s500
      %p507 = scmp.eq.s32.totalorder %s35, 2
      %p508 = por %p506, %p507
      %p509 = scmp.ne.s32.totalorder %s500, %s501
      %p510 = scmp.eq.s32.totalorder %s35, 0
      %p511 = por %p509, %p510
      %p512 = scmp.ne.s32.totalorder %s500, %s501
      %p513 = scmp.eq.s32.totalorder %s36, 2
      %p514 = por %p512, %p513
      %p516 = scmp.ne.s32.totalorder %s501, %s515
      %p517 = scmp.eq.s32.totalorder %s36, 0
      %p518 = por %p516, %p517
      %s520 = sadd.s32 %s519, 1
      %p523 = scmp.eq.s32.totalorder %s30, 2
      %p524 = scmp.ne.s32.totalorder %s519, %s521
      %p525 = scmp.eq.s32.totalorder %s30, 0
      %p526 = por %p524, %p525
      %p527 = scmp.ne.s32.totalorder %s519, %s521
      %p528 = scmp.eq.s32.totalorder %s35, 2
      %p529 = por %p527, %p528
      %p530 = scmp.ne.s32.totalorder %s521, %s522
      %p531 = scmp.eq.s32.totalorder %s35, 0
      %p532 = por %p530, %p531
      %p533 = scmp.ne.s32.totalorder %s521, %s522
      %p534 = scmp.eq.s32.totalorder %s36, 2
      %p535 = por %p533, %p534
      %p537 = scmp.ne.s32.totalorder %s522, %s536
      %p538 = scmp.eq.s32.totalorder %s36, 0
      %p539 = por %p537, %p538
      %s541 = sadd.s32 %s540, 1
      %p544 = scmp.eq.s32.totalorder %s30, 2
      %p545 = scmp.ne.s32.totalorder %s540, %s542
      %p546 = scmp.eq.s32.totalorder %s30, 0
      %p547 = por %p545, %p546
      %p548 = scmp.ne.s32.totalorder %s540, %s542
      %p549 = scmp.eq.s32.totalorder %s35, 2
      %p550 = por %p548, %p549
      %p551 = scmp.ne.s32.totalorder %s542, %s543
      %p552 = scmp.eq.s32.totalorder %s35, 0
      %p553 = por %p551, %p552
      %p554 = scmp.ne.s32.totalorder %s542, %s543
      %p555 = scmp.eq.s32.totalorder %s36, 2
      %p556 = por %p554, %p555
      %p558 = scmp.ne.s32.totalorder %s543, %s557
      %p559 = scmp.eq.s32.totalorder %s36, 0
      %p560 = por %p558, %p559
      %p561 = scmp.le.s32.totalorder 1, %s30
      %p562 = scmp.lt.s32.totalorder %s30, 4
      %p563 = pnand %p561, %p562
      %p564 = pneg %p563
      // Predicated region
      $region9: #{cgip_forward.1} parent=5 // pred_check
        _
      $region10: #{cgip_forward.1} parent=5 // pred_check_branch
        %566 = sbr.rel (%p563) target = $region12
      $region11: #{cgip_forward.1} parent=5 // pred_region
        %s567 = ssub.s32 %s30, 1
        // Predicated region
        $region13: #{cgip_forward.1} parent=11 // pred_check
          %p568 = pneg %p51
        $region14: #{cgip_forward.1} parent=11 // pred_check_branch
          %570 = sbr.rel (%p568) target = $region16
        $region15: #{cgip_forward.1} parent=11 // pred_region
          _
        $region16: #{cgip_forward.1} parent=11 // pred_fallthru
          _
        // Predicated region
        $region17: #{cgip_forward.1} parent=11 // pred_check
          %p571 = pneg %p72
        $region18: #{cgip_forward.1} parent=11 // pred_check_branch
          %573 = sbr.rel (%p571) target = $region20
        $region19: #{cgip_forward.1} parent=11 // pred_region
          _
        $region20: #{cgip_forward.1} parent=11 // pred_fallthru
          _
        // Predicated region
        $region21: #{cgip_forward.1} parent=11 // pred_check
          %p574 = pneg %p93
        $region22: #{cgip_forward.1} parent=11 // pred_check_branch
          %576 = sbr.rel (%p574) target = $region24
        $region23: #{cgip_forward.1} parent=11 // pred_region
          _
        $region24: #{cgip_forward.1} parent=11 // pred_fallthru
          _
        // Predicated region
        $region25: #{cgip_forward.1} parent=11 // pred_check
          %p577 = pneg %p114
        $region26: #{cgip_forward.1} parent=11 // pred_check_branch
          %579 = sbr.rel (%p577) target = $region28
        $region27: #{cgip_forward.1} parent=11 // pred_region
          _
        $region28: #{cgip_forward.1} parent=11 // pred_fallthru
          _
        // Predicated region
        $region29: #{cgip_forward.1} parent=11 // pred_check
          %p580 = pneg %p135
        $region30: #{cgip_forward.1} parent=11 // pred_check_branch
          %582 = sbr.rel (%p580) target = $region32
        $region31: #{cgip_forward.1} parent=11 // pred_region
          _
        $region32: #{cgip_forward.1} parent=11 // pred_fallthru
          _
        // Predicated region
        $region33: #{cgip_forward.1} parent=11 // pred_check
          %p583 = pneg %p156
        $region34: #{cgip_forward.1} parent=11 // pred_check_branch
          %585 = sbr.rel (%p583) target = $region36
        $region35: #{cgip_forward.1} parent=11 // pred_region
          _
        $region36: #{cgip_forward.1} parent=11 // pred_fallthru
          _
        // Predicated region
        $region37: #{cgip_forward.1} parent=11 // pred_check
          %p586 = pneg %p177
        $region38: #{cgip_forward.1} parent=11 // pred_check_branch
          %588 = sbr.rel (%p586) target = $region40
        $region39: #{cgip_forward.1} parent=11 // pred_region
          _
        $region40: #{cgip_forward.1} parent=11 // pred_fallthru
          _
        // Predicated region
        $region41: #{cgip_forward.1} parent=11 // pred_check
          %p589 = pneg %p198
        $region42: #{cgip_forward.1} parent=11 // pred_check_branch
          %591 = sbr.rel (%p589) target = $region44
        $region43: #{cgip_forward.1} parent=11 // pred_region
          _
        $region44: #{cgip_forward.1} parent=11 // pred_fallthru
          _
        // Predicated region
        $region45: #{cgip_forward.1} parent=11 // pred_check
          %p592 = pneg %p219
        $region46: #{cgip_forward.1} parent=11 // pred_check_branch
          %594 = sbr.rel (%p592) target = $region48
        $region47: #{cgip_forward.1} parent=11 // pred_region
          _
        $region48: #{cgip_forward.1} parent=11 // pred_fallthru
          _
        // Predicated region
        $region49: #{cgip_forward.1} parent=11 // pred_check
          %p595 = pneg %p240
        $region50: #{cgip_forward.1} parent=11 // pred_check_branch
          %597 = sbr.rel (%p595) target = $region52
        $region51: #{cgip_forward.1} parent=11 // pred_region
          _
        $region52: #{cgip_forward.1} parent=11 // pred_fallthru
          _
        // Predicated region
        $region53: #{cgip_forward.1} parent=11 // pred_check
          %p598 = pneg %p469
        $region54: #{cgip_forward.1} parent=11 // pred_check_branch
          %600 = sbr.rel (%p598) target = $region56
        $region55: #{cgip_forward.1} parent=11 // pred_region
          _
        $region56: #{cgip_forward.1} parent=11 // pred_fallthru
          _
        // Predicated region
        $region57: #{cgip_forward.1} parent=11 // pred_check
          %p601 = pneg %p490
        $region58: #{cgip_forward.1} parent=11 // pred_check_branch
          %603 = sbr.rel (%p601) target = $region60
        $region59: #{cgip_forward.1} parent=11 // pred_region
          _
        $region60: #{cgip_forward.1} parent=11 // pred_fallthru
          _
        // Predicated region
        $region61: #{cgip_forward.1} parent=11 // pred_check
          %p604 = pneg %p511
        $region62: #{cgip_forward.1} parent=11 // pred_check_branch
          %606 = sbr.rel (%p604) target = $region64
        $region63: #{cgip_forward.1} parent=11 // pred_region
          _
        $region64: #{cgip_forward.1} parent=11 // pred_fallthru
          _
      $region12: #{cgip_forward.1} parent=5 // pred_fallthru
        _
      %p607 = scmp.lt.s32.totalorder %s30, 3
      // Predicated region
      $region65: #{cgip_forward.1} parent=5 // pred_check
        %p608 = pneg %p607
      $region66: #{cgip_forward.1} parent=5 // pred_check_branch
        %610 = sbr.rel (%p608) target = $region68
      $region67: #{cgip_forward.1} parent=5 // pred_region
        // Predicated region
        $region69: #{cgip_forward.1} parent=67 // pred_check
          %p611 = pneg %p260
        $region70: #{cgip_forward.1} parent=67 // pred_check_branch
          %613 = sbr.rel (%p611) target = $region72
        $region71: #{cgip_forward.1} parent=67 // pred_region
          %p614 = scmp.lt.s32.totalorder %s30, 2
          %s615 = scalar_select %p614, %s30, 2
          %s616 = smul.addr %s615, 48
          %s617 = smul.addr %s616, 4
          %s618 = scalar_lea.vmem %s10, %s617
        $region72: #{cgip_forward.1} parent=67 // pred_fallthru
          _
        // Predicated region
        $region73: #{cgip_forward.1} parent=67 // pred_check
          %p619 = pneg %p286
        $region74: #{cgip_forward.1} parent=67 // pred_check_branch
          %621 = sbr.rel (%p619) target = $region76
        $region75: #{cgip_forward.1} parent=67 // pred_region
          %p622 = scmp.lt.s32.totalorder %s30, 2
          %s623 = scalar_select %p622, %s30, 2
          %s624 = scalar_lea.vmem %s11, %s623
        $region76: #{cgip_forward.1} parent=67 // pred_fallthru
          _
        // Predicated region
        $region77: #{cgip_forward.1} parent=67 // pred_check
          %p625 = pneg %p312
        $region78: #{cgip_forward.1} parent=67 // pred_check_branch
          %627 = sbr.rel (%p625) target = $region80
        $region79: #{cgip_forward.1} parent=67 // pred_region
          %p628 = scmp.lt.s32.totalorder %s30, 2
          %s629 = scalar_select %p628, %s30, 2
          %s630 = smul.addr %s629, 48
          %s631 = smul.addr %s630, 4
          %s632 = scalar_lea.vmem %s12, %s631
        $region80: #{cgip_forward.1} parent=67 // pred_fallthru
          _
        // Predicated region
        $region81: #{cgip_forward.1} parent=67 // pred_check
          %p633 = pneg %p338
        $region82: #{cgip_forward.1} parent=67 // pred_check_branch
          %635 = sbr.rel (%p633) target = $region84
        $region83: #{cgip_forward.1} parent=67 // pred_region
          %p636 = scmp.lt.s32.totalorder %s30, 2
          %s637 = scalar_select %p636, %s30, 2
          %s638 = smul.addr %s637, 3
          %s639 = scalar_lea.vmem %s13, %s638
        $region84: #{cgip_forward.1} parent=67 // pred_fallthru
          _
        // Predicated region
        $region85: #{cgip_forward.1} parent=67 // pred_check
          %p640 = pneg %p364
        $region86: #{cgip_forward.1} parent=67 // pred_check_branch
          %642 = sbr.rel (%p640) target = $region88
        $region87: #{cgip_forward.1} parent=67 // pred_region
          %p643 = scmp.lt.s32.totalorder %s30, 2
          %s644 = scalar_select %p643, %s30, 2
          %s645 = smul.addr %s644, 16
          %s646 = smul.addr %s645, 4
          %s647 = scalar_lea.vmem %s14, %s646
        $region88: #{cgip_forward.1} parent=67 // pred_fallthru
          _
        // Predicated region
        $region89: #{cgip_forward.1} parent=67 // pred_check
          %p648 = pneg %p390
        $region90: #{cgip_forward.1} parent=67 // pred_check_branch
          %650 = sbr.rel (%p648) target = $region92
        $region91: #{cgip_forward.1} parent=67 // pred_region
          %p651 = scmp.lt.s32.totalorder %s30, 2
          %s652 = scalar_select %p651, %s30, 2
          %s653 = scalar_lea.vmem %s15, %s652
        $region92: #{cgip_forward.1} parent=67 // pred_fallthru
          _
        // Predicated region
        $region93: #{cgip_forward.1} parent=67 // pred_check
          %p654 = pneg %p416
        $region94: #{cgip_forward.1} parent=67 // pred_check_branch
          %656 = sbr.rel (%p654) target = $region96
        $region95: #{cgip_forward.1} parent=67 // pred_region
          %p657 = scmp.lt.s32.totalorder %s30, 2
          %s658 = scalar_select %p657, %s30, 2
          %s659 = smul.addr %s658, 16
          %s660 = smul.addr %s659, 4
          %s661 = scalar_lea.vmem %s16, %s660
        $region96: #{cgip_forward.1} parent=67 // pred_fallthru
          _
        // Predicated region
        $region97: #{cgip_forward.1} parent=67 // pred_check
          %p662 = pneg %p442
        $region98: #{cgip_forward.1} parent=67 // pred_check_branch
          %664 = sbr.rel (%p662) target = $region100
        $region99: #{cgip_forward.1} parent=67 // pred_region
          %p665 = scmp.lt.s32.totalorder %s30, 2
          %s666 = scalar_select %p665, %s30, 2
          %s667 = scalar_lea.vmem %s17, %s666
        $region100: #{cgip_forward.1} parent=67 // pred_fallthru
          _
      $region68: #{cgip_forward.1} parent=5 // pred_fallthru
        _
      %p668 = scmp.le.s32.totalorder 1, %s30
      %p669 = scmp.lt.s32.totalorder %s30, 4
      %p670 = pnand %p668, %p669
      %p671 = pneg %p670
      // Predicated region
      $region101: #{cgip_forward.1} parent=5 // pred_check
        _
      $region102: #{cgip_forward.1} parent=5 // pred_check_branch
        %673 = sbr.rel (%p670) target = $region104
      $region103: #{cgip_forward.1} parent=5 // pred_region
        %s674 = ssub.s32 %s30, 1
        %p675 = pneg %p51
        %p676 = pneg %p48
        %p677 = pneg %p72
        %p678 = pneg %p69
        %p679 = pneg %p93
        %p680 = pneg %p90
        %p681 = pneg %p114
        %p682 = pneg %p111
        %p683 = pneg %p135
        %p684 = pneg %p132
        %p685 = pneg %p156
        %p686 = pneg %p153
        %p687 = pneg %p177
        %p688 = pneg %p174
        %p689 = pneg %p198
        %p690 = pneg %p195
        %p691 = pneg %p219
        %p692 = pneg %p216
        %p693 = pneg %p240
        %p694 = pneg %p237
        %p695 = scmp.lt.s32.totalorder %s35, 2
        %s696 = scalar_select %p695, %s35, 2
        %s697 = smul.addr %s696, 48
        %s698 = smul.addr %s697, 4
        %s699 = scalar_lea.vmem %s10, %s698
        %p700 = pneg %p266
        %p701 = pneg %p263
        %p702 = scmp.lt.s32.totalorder %s35, 2
        %s703 = scalar_select %p702, %s35, 2
        %s704 = scalar_lea.vmem %s11, %s703
        %p705 = pneg %p292
        %p706 = pneg %p289
        %p707 = scmp.lt.s32.totalorder %s35, 2
        %s708 = scalar_select %p707, %s35, 2
        %s709 = smul.addr %s708, 48
        %s710 = smul.addr %s709, 4
        %s711 = scalar_lea.vmem %s12, %s710
        %p712 = pneg %p318
        %p713 = pneg %p315
        %p714 = scmp.lt.s32.totalorder %s35, 2
        %s715 = scalar_select %p714, %s35, 2
        %s716 = smul.addr %s715, 3
        %s717 = scalar_lea.vmem %s13, %s716
        %p718 = pneg %p344
        %p719 = pneg %p341
        %p720 = scmp.lt.s32.totalorder %s35, 2
        %s721 = scalar_select %p720, %s35, 2
        %s722 = smul.addr %s721, 16
        %s723 = smul.addr %s722, 4
        %s724 = scalar_lea.vmem %s14, %s723
        %p725 = pneg %p370
        %p726 = pneg %p367
        %p727 = scmp.lt.s32.totalorder %s35, 2
        %s728 = scalar_select %p727, %s35, 2
        %s729 = scalar_lea.vmem %s15, %s728
        %p730 = pneg %p396
        %p731 = pneg %p393
        %p732 = scmp.lt.s32.totalorder %s35, 2
        %s733 = scalar_select %p732, %s35, 2
        %s734 = smul.addr %s733, 16
        %s735 = smul.addr %s734, 4
        %s736 = scalar_lea.vmem %s16, %s735
        %p737 = pneg %p422
        %p738 = pneg %p419
        %p739 = scmp.lt.s32.totalorder %s35, 2
        %s740 = scalar_select %p739, %s35, 2
        %s741 = scalar_lea.vmem %s17, %s740
        %p742 = pneg %p448
        %p743 = pneg %p445
        %p744 = pneg %p469
        %p745 = pneg %p466
        %p746 = pneg %p490
        %p747 = pneg %p487
        %p748 = pneg %p511
        %p749 = pneg %p508
        %p750 = pneg %p532
        %p751 = pneg %p529
        %p752 = pneg %p553
        %p753 = pneg %p550
        %p754 = scmp.lt.s32.totalorder %s35, 2
        %s755 = scalar_select %p754, %s35, 2
        %s756 = smul.addr %s755, 48
        %s757 = smul.addr %s756, 4
        %s758 = scalar_lea.vmem %s10, %s757
        %p759 = scmp.lt.s32.totalorder %s35, 2
        %s760 = scalar_select %p759, %s35, 2
        %s761 = scalar_lea.vmem %s11, %s760
        %p762 = scmp.lt.s32.totalorder %s35, 2
        %s763 = scalar_select %p762, %s35, 2
        %s764 = smul.addr %s763, 48
        %s765 = smul.addr %s764, 4
        %s766 = scalar_lea.vmem %s12, %s765
        %p767 = scmp.lt.s32.totalorder %s35, 2
        %s768 = scalar_select %p767, %s35, 2
        %s769 = smul.addr %s768, 3
        %s770 = scalar_lea.vmem %s13, %s769
        %p771 = scmp.lt.s32.totalorder %s35, 2
        %s772 = scalar_select %p771, %s35, 2
        %s773 = smul.addr %s772, 16
        %s774 = smul.addr %s773, 4
        %s775 = scalar_lea.vmem %s14, %s774
        %p776 = scmp.lt.s32.totalorder %s35, 2
        %s777 = scalar_select %p776, %s35, 2
        %s778 = scalar_lea.vmem %s15, %s777
        %p779 = scmp.lt.s32.totalorder %s35, 2
        %s780 = scalar_select %p779, %s35, 2
        %s781 = smul.addr %s780, 16
        %s782 = smul.addr %s781, 4
        %s783 = scalar_lea.vmem %s16, %s782
        %p784 = scmp.lt.s32.totalorder %s35, 2
        %s785 = scalar_select %p784, %s35, 2
        %s786 = scalar_lea.vmem %s17, %s785
        %p788 = scmp.eq.s32.totalorder %s35, 0
        // Predicated region
        $region105: #{cgip_forward.1} parent=103 // pred_check
          %p789 = pneg %p788
        $region106: #{cgip_forward.1} parent=103 // pred_check_branch
          %791 = sbr.rel (%p789) target = $region108
        $region107: #{cgip_forward.1} parent=103 // pred_region
          %v792 = vld [vmem:[%s0] sm:$0xff]
          %793 = vst [vmem:[#allocation4] sm:$0xff] %v792
          %v794 = vld [vmem:[%s1] sm:$0xff]
          %795 = vst [vmem:[#allocation5] sm:$0xff] %v794
          %v796 = vlaneseq
          %v797 = vand.u32 %v796, 127
          %v798 = vld [vmem:[%s2] sm:$0xff]
          %v799 = vld [vmem:[%s2 + $0x8] sm:$0xff]
          %800 = vset.pattern.permute.xlu0 0
          %801 = vperm.xlu0 %800, %v798
          %v802 = vpop.permute.xlu0 %801
          %803 = vset.pattern.permute.xlu0 0
          %804 = vperm.xlu0 %803, %v799
          %v805 = vpop.permute.xlu0 %804
          %vm806 = vcmp.eq.s32.totalorder %v797, %v802
          %vm807 = vcmp.eq.s32.totalorder %v797, %v805
          %v808 = vsel %vm806, 1, 0
          %v809 = vsel %vm807, 1, 0
          %v810 = vcvt.s32.f32 %v808
          %v811 = vcvt.s32.f32 %v809
          %v812 = vpack.c.bf16 %v810, %v810
          %v813 = vpack.c.bf16 %v811, %v811
          %vm814 = vcmask 60416
          %815 = vst.msk [vmem:[#allocation2] sm:$0xf] %vm814, %v812
          %816 = vst.msk [vmem:[#allocation2 + $0x4] sm:$0xf] %vm814, %v813
          %v817 = vlaneseq
          %v818 = vshrl.u32 %v817, 7
          %v819 = vld [vmem:[%s3] sm:$0x1]
          %v820 = vperm.slane %v819, 0
          %vm821 = vcmp.eq.s32.totalorder %v818, %v820
          %v822 = vsel %vm821, 1, 0
          %v823 = vcvt.s32.f32 %v822
          %v824 = vpack.c.bf16 %v823, %v823
          %vm825 = vcmask 125952
          %826 = vst.msk [vmem:[#allocation3] sm:$0xf] %vm825, %v824
        $region108: #{cgip_forward.1} parent=103 // pred_fallthru
          _
        %v827 = vld [vmem:[#allocation4] sm:$0xff]
        %v828 = vld [vmem:[#allocation5] sm:$0xff]
        %v829 = vld [vmem:[#allocation2] sm:$0xf]
        %v830 = vld [vmem:[#allocation2 + $0x4] sm:$0xf]
        %v831 = vld [vmem:[#allocation3] sm:$0xf]
        %v832 = vpack.c.bf16 %v827, %v827
        %v835 = vunpack.c.l.b16 %v829
        %v836 = vunpack.c.l.b16 %v830
        %v837 = vpack.c.b16 %v836, %v835
        %vm838 = vcmask 64512
        %v840 = vsel %vm838, %v837, 0
        %vm842 = vcmask 1043456
        %v844 = vsel %vm842, %v832, 0
        %846 = vmatpush.bf16.msra.mxu0 0
        %847 = vmatpush.bf16.msra.mxu0 0
        %848 = vmatpush.bf16.msra.mxu0 0
        %849 = vmatpush.bf16.msra.mxu0 0
        %850 = vmatpush.bf16.msra.mxu0 0
        %851 = vmatpush.bf16.msra.mxu0 0
        %852 = vmatpush.bf16.msra.mxu0 0
        %853 = vmatpush.bf16.msra.mxu0 %v844
        %854 = vmatmul.bf16.gmra.mxu0 %v840
        %v855 = vpop.f32.mrf.mxu0
        %v856 = vadd.f32 0.0, %v855
        %v857 = vpop.f32.mrf.mxu0
        %v858 = vadd.f32 0.0, %v857
        %859 = vdwg.mxu0
        %v860 = vld [vmem:[%s758] sm:$0xf]
        %v861 = vld [vmem:[%s758 + $0x4] sm:$0xf]
        %v862 = vld [vmem:[%s758 + $0x8] sm:$0xf]
        %v863 = vld [vmem:[%s758 + $0xc] sm:$0xf]
        %v864 = vld [vmem:[%s758 + $0x10] sm:$0xf]
        %v865 = vld [vmem:[%s758 + $0x14] sm:$0xf]
        %v866 = vld [vmem:[%s758 + $0x18] sm:$0xf]
        %v867 = vld [vmem:[%s758 + $0x1c] sm:$0xf]
        %v868 = vld [vmem:[%s758 + $0x20] sm:$0xf]
        %v869 = vld [vmem:[%s758 + $0x24] sm:$0xf]
        %v870 = vld [vmem:[%s758 + $0x28] sm:$0xf]
        %v871 = vld [vmem:[%s758 + $0x2c] sm:$0xf]
        %v872 = vld [vmem:[%s758 + $0x30] sm:$0xf]
        %v873 = vld [vmem:[%s758 + $0x34] sm:$0xf]
        %v874 = vld [vmem:[%s758 + $0x38] sm:$0xf]
        %v875 = vld [vmem:[%s758 + $0x3c] sm:$0xf]
        %v876 = vld [vmem:[%s758 + $0x40] sm:$0xf]
        %v877 = vld [vmem:[%s758 + $0x44] sm:$0xf]
        %v878 = vld [vmem:[%s758 + $0x48] sm:$0xf]
        %v879 = vld [vmem:[%s758 + $0x4c] sm:$0xf]
        %v880 = vld [vmem:[%s758 + $0x50] sm:$0xf]
        %v881 = vld [vmem:[%s758 + $0x54] sm:$0xf]
        %v882 = vld [vmem:[%s758 + $0x58] sm:$0xf]
        %v883 = vld [vmem:[%s758 + $0x5c] sm:$0xf]
        %v884 = vld [vmem:[%s758 + $0x60] sm:$0xf]
        %v885 = vld [vmem:[%s758 + $0x64] sm:$0xf]
        %v886 = vld [vmem:[%s758 + $0x68] sm:$0xf]
        %v887 = vld [vmem:[%s758 + $0x6c] sm:$0xf]
        %v888 = vld [vmem:[%s758 + $0x70] sm:$0xf]
        %v889 = vld [vmem:[%s758 + $0x74] sm:$0xf]
        %v890 = vld [vmem:[%s758 + $0x78] sm:$0xf]
        %v891 = vld [vmem:[%s758 + $0x7c] sm:$0xf]
        %v892 = vld [vmem:[%s758 + $0x80] sm:$0xf]
        %v893 = vld [vmem:[%s758 + $0x84] sm:$0xf]
        %v894 = vld [vmem:[%s758 + $0x88] sm:$0xf]
        %v895 = vld [vmem:[%s758 + $0x8c] sm:$0xf]
        %v896 = vld [vmem:[%s758 + $0x90] sm:$0xf]
        %v897 = vld [vmem:[%s758 + $0x94] sm:$0xf]
        %v898 = vld [vmem:[%s758 + $0x98] sm:$0xf]
        %v899 = vld [vmem:[%s758 + $0x9c] sm:$0xf]
        %v900 = vld [vmem:[%s758 + $0xa0] sm:$0xf]
        %v901 = vld [vmem:[%s758 + $0xa4] sm:$0xf]
        %v902 = vld [vmem:[%s758 + $0xa8] sm:$0xf]
        %v903 = vld [vmem:[%s758 + $0xac] sm:$0xf]
        %v904 = vld [vmem:[%s758 + $0xb0] sm:$0xf]
        %v905 = vld [vmem:[%s758 + $0xb4] sm:$0xf]
        %v906 = vld [vmem:[%s758 + $0xb8] sm:$0xf]
        %v907 = vld [vmem:[%s758 + $0xbc] sm:$0xf]
        %v908 = vpack.c.bf16 %v856, %v856
        %v909 = vpack.c.bf16 %v828, %v828
        %v926 = vunpack.c.l.b16 %v876
        %v927 = vunpack.c.l.b16 %v877
        %v928 = vunpack.c.l.b16 %v878
        %v929 = vunpack.c.l.b16 %v879
        %v930 = vunpack.c.l.b16 %v880
        %v931 = vunpack.c.l.b16 %v881
        %v932 = vunpack.c.l.b16 %v882
        %v933 = vunpack.c.l.b16 %v883
        %v934 = vunpack.c.l.b16 %v884
        %v935 = vunpack.c.l.b16 %v885
        %v936 = vunpack.c.l.b16 %v886
        %v937 = vunpack.c.l.b16 %v887
        %v938 = vunpack.c.l.b16 %v888
        %v939 = vunpack.c.l.b16 %v889
        %v940 = vunpack.c.l.b16 %v890
        %v941 = vunpack.c.l.b16 %v891
        %v942 = vpack.c.b16 %v927, %v926
        %v943 = vpack.c.b16 %v929, %v928
        %v944 = vpack.c.b16 %v931, %v930
        %v945 = vpack.c.b16 %v933, %v932
        %v946 = vpack.c.b16 %v935, %v934
        %v947 = vpack.c.b16 %v937, %v936
        %v948 = vpack.c.b16 %v939, %v938
        %v949 = vpack.c.b16 %v941, %v940
        %958 = vmatpush.bf16.msra.mxu0 %v949
        %959 = vmatpush.bf16.msra.mxu0 %v948
        %960 = vmatpush.bf16.msra.mxu0 %v947
        %961 = vmatpush.bf16.msra.mxu0 %v946
        %962 = vmatpush.bf16.msra.mxu0 %v945
        %963 = vmatpush.bf16.msra.mxu0 %v944
        %964 = vmatpush.bf16.msra.mxu0 %v943
        %965 = vmatpush.bf16.msra.mxu0 %v942
        %966 = vmatmul.bf16.gmra.mxu0 %v909
        %v967 = vpop.f32.mrf.mxu0
        %v968 = vadd.f32 0.0, %v967
        %v969 = vpop.f32.mrf.mxu0
        %970 = vdwg.mxu0
        %v987 = vunpack.c.l.b16 %v860
        %v988 = vunpack.c.l.b16 %v861
        %v989 = vunpack.c.l.b16 %v862
        %v990 = vunpack.c.l.b16 %v863
        %v991 = vunpack.c.l.b16 %v864
        %v992 = vunpack.c.l.b16 %v865
        %v993 = vunpack.c.l.b16 %v866
        %v994 = vunpack.c.l.b16 %v867
        %v995 = vunpack.c.l.b16 %v868
        %v996 = vunpack.c.l.b16 %v869
        %v997 = vunpack.c.l.b16 %v870
        %v998 = vunpack.c.l.b16 %v871
        %v999 = vunpack.c.l.b16 %v872
        %v1000 = vunpack.c.l.b16 %v873
        %v1001 = vunpack.c.l.b16 %v874
        %v1002 = vunpack.c.l.b16 %v875
        %v1003 = vpack.c.b16 %v988, %v987
        %v1004 = vpack.c.b16 %v990, %v989
        %v1005 = vpack.c.b16 %v992, %v991
        %v1006 = vpack.c.b16 %v994, %v993
        %v1007 = vpack.c.b16 %v996, %v995
        %v1008 = vpack.c.b16 %v998, %v997
        %v1009 = vpack.c.b16 %v1000, %v999
        %v1010 = vpack.c.b16 %v1002, %v1001
        %1019 = vmatpush.bf16.msra.mxu0 %v1010
        %1020 = vmatpush.bf16.msra.mxu0 %v1009
        %1021 = vmatpush.bf16.msra.mxu0 %v1008
        %1022 = vmatpush.bf16.msra.mxu0 %v1007
        %1023 = vmatpush.bf16.msra.mxu0 %v1006
        %1024 = vmatpush.bf16.msra.mxu0 %v1005
        %1025 = vmatpush.bf16.msra.mxu0 %v1004
        %1026 = vmatpush.bf16.msra.mxu0 %v1003
        %1027 = vmatmul.bf16.gmra.mxu0 %v908
        %v1028 = vpop.f32.mrf.mxu0
        %v1029 = vadd.f32 %v968, %v1028
        %v1030 = vpop.f32.mrf.mxu0
        %1031 = vdwg.mxu0
        %v1032 = vpack.c.bf16 %v858, %v858
        %v1049 = vunpack.c.l.b16 %v892
        %v1050 = vunpack.c.l.b16 %v893
        %v1051 = vunpack.c.l.b16 %v894
        %v1052 = vunpack.c.l.b16 %v895
        %v1053 = vunpack.c.l.b16 %v896
        %v1054 = vunpack.c.l.b16 %v897
        %v1055 = vunpack.c.l.b16 %v898
        %v1056 = vunpack.c.l.b16 %v899
        %v1057 = vunpack.c.l.b16 %v900
        %v1058 = vunpack.c.l.b16 %v901
        %v1059 = vunpack.c.l.b16 %v902
        %v1060 = vunpack.c.l.b16 %v903
        %v1061 = vunpack.c.l.b16 %v904
        %v1062 = vunpack.c.l.b16 %v905
        %v1063 = vunpack.c.l.b16 %v906
        %v1064 = vunpack.c.l.b16 %v907
        %v1065 = vpack.c.b16 %v1050, %v1049
        %v1066 = vpack.c.b16 %v1052, %v1051
        %v1067 = vpack.c.b16 %v1054, %v1053
        %v1068 = vpack.c.b16 %v1056, %v1055
        %v1069 = vpack.c.b16 %v1058, %v1057
        %v1070 = vpack.c.b16 %v1060, %v1059
        %v1071 = vpack.c.b16 %v1062, %v1061
        %v1072 = vpack.c.b16 %v1064, %v1063
        %1081 = vmatpush.bf16.msra.mxu0 %v1072
        %1082 = vmatpush.bf16.msra.mxu0 %v1071
        %1083 = vmatpush.bf16.msra.mxu0 %v1070
        %1084 = vmatpush.bf16.msra.mxu0 %v1069
        %1085 = vmatpush.bf16.msra.mxu0 %v1068
        %1086 = vmatpush.bf16.msra.mxu0 %v1067
        %1087 = vmatpush.bf16.msra.mxu0 %v1066
        %1088 = vmatpush.bf16.msra.mxu0 %v1065
        %1089 = vmatmul.bf16.gmra.mxu0 %v1032
        %v1090 = vpop.f32.mrf.mxu0
        %v1091 = vadd.f32 0.0, %v1090
        %v1092 = vpop.f32.mrf.mxu0
        %1093 = vdwg.mxu0
        %v1094 = vadd.f32 %v1029, %v1091
        %v1095 = vld [vmem:[%s761] sm:$0x1]
        %v1097 = vperm.slane %v1095, 0
        %v1099 = vadd.f32 %v1094, %v1097
        %v1100 = vmax.f32 %v1099, 0.0
        %v1101 = vld [vmem:[%s766] sm:$0xff]
        %v1102 = vld [vmem:[%s766 + $0x8] sm:$0xf]
        %v1103 = vld [vmem:[%s766 + $0xc] sm:$0xff]
        %v1104 = vld [vmem:[%s766 + $0x14] sm:$0xf]
        %v1105 = vld [vmem:[%s766 + $0x18] sm:$0xff]
        %v1106 = vld [vmem:[%s766 + $0x20] sm:$0xf]
        %v1107 = vld [vmem:[%s766 + $0x24] sm:$0xff]
        %v1108 = vld [vmem:[%s766 + $0x2c] sm:$0xf]
        %v1109 = vld [vmem:[%s766 + $0x30] sm:$0xff]
        %v1110 = vld [vmem:[%s766 + $0x38] sm:$0xf]
        %v1111 = vld [vmem:[%s766 + $0x3c] sm:$0xff]
        %v1112 = vld [vmem:[%s766 + $0x44] sm:$0xf]
        %v1113 = vld [vmem:[%s766 + $0x48] sm:$0xff]
        %v1114 = vld [vmem:[%s766 + $0x50] sm:$0xf]
        %v1115 = vld [vmem:[%s766 + $0x54] sm:$0xff]
        %v1116 = vld [vmem:[%s766 + $0x5c] sm:$0xf]
        %v1117 = vld [vmem:[%s766 + $0x60] sm:$0xff]
        %v1118 = vld [vmem:[%s766 + $0x68] sm:$0xf]
        %v1119 = vld [vmem:[%s766 + $0x6c] sm:$0xff]
        %v1120 = vld [vmem:[%s766 + $0x74] sm:$0xf]
        %v1121 = vld [vmem:[%s766 + $0x78] sm:$0xff]
        %v1122 = vld [vmem:[%s766 + $0x80] sm:$0xf]
        %v1123 = vld [vmem:[%s766 + $0x84] sm:$0xff]
        %v1124 = vld [vmem:[%s766 + $0x8c] sm:$0xf]
        %v1125 = vld [vmem:[%s766 + $0x90] sm:$0xff]
        %v1126 = vld [vmem:[%s766 + $0x98] sm:$0xf]
        %v1127 = vld [vmem:[%s766 + $0x9c] sm:$0xff]
        %v1128 = vld [vmem:[%s766 + $0xa4] sm:$0xf]
        %v1129 = vld [vmem:[%s766 + $0xa8] sm:$0xff]
        %v1130 = vld [vmem:[%s766 + $0xb0] sm:$0xf]
        %v1131 = vld [vmem:[%s766 + $0xb4] sm:$0xff]
        %v1132 = vld [vmem:[%s766 + $0xbc] sm:$0xf]
        %v1133 = vpack.c.bf16 %v1100, %v1100
        %v1134 = vld [vmem:[%s770] sm:$0x7]
        %v1136 = vperm.slane %v1134, 0
        %v1137 = vperm.slane %v1134, 1
        %v1138 = vperm.slane %v1134, 2
        %v1174 = vunpack.c.l.b16 %v1101
        %v1175 = vunpack.c.h.b16 %v1101
        %v1176 = vunpack.c.l.b16 %v1102
        %v1177 = vunpack.c.l.b16 %v1103
        %v1178 = vunpack.c.h.b16 %v1103
        %v1179 = vunpack.c.l.b16 %v1104
        %v1180 = vunpack.c.l.b16 %v1105
        %v1181 = vunpack.c.h.b16 %v1105
        %v1182 = vunpack.c.l.b16 %v1106
        %v1183 = vunpack.c.l.b16 %v1107
        %v1184 = vunpack.c.h.b16 %v1107
        %v1185 = vunpack.c.l.b16 %v1108
        %v1186 = vunpack.c.l.b16 %v1109
        %v1187 = vunpack.c.h.b16 %v1109
        %v1188 = vunpack.c.l.b16 %v1110
        %v1189 = vunpack.c.l.b16 %v1111
        %v1190 = vunpack.c.h.b16 %v1111
        %v1191 = vunpack.c.l.b16 %v1112
        %v1192 = vunpack.c.l.b16 %v1113
        %v1193 = vunpack.c.h.b16 %v1113
        %v1194 = vunpack.c.l.b16 %v1114
        %v1195 = vunpack.c.l.b16 %v1115
        %v1196 = vunpack.c.h.b16 %v1115
        %v1197 = vunpack.c.l.b16 %v1116
        %v1198 = vunpack.c.l.b16 %v1117
        %v1199 = vunpack.c.h.b16 %v1117
        %v1200 = vunpack.c.l.b16 %v1118
        %v1201 = vunpack.c.l.b16 %v1119
        %v1202 = vunpack.c.h.b16 %v1119
        %v1203 = vunpack.c.l.b16 %v1120
        %v1204 = vunpack.c.l.b16 %v1121
        %v1205 = vunpack.c.h.b16 %v1121
        %v1206 = vunpack.c.l.b16 %v1122
        %v1207 = vunpack.c.l.b16 %v1123
        %v1208 = vunpack.c.h.b16 %v1123
        %v1209 = vunpack.c.l.b16 %v1124
        %v1210 = vunpack.c.l.b16 %v1125
        %v1211 = vunpack.c.h.b16 %v1125
        %v1212 = vunpack.c.l.b16 %v1126
        %v1213 = vunpack.c.l.b16 %v1127
        %v1214 = vunpack.c.h.b16 %v1127
        %v1215 = vunpack.c.l.b16 %v1128
        %v1216 = vunpack.c.l.b16 %v1129
        %v1217 = vunpack.c.h.b16 %v1129
        %v1218 = vunpack.c.l.b16 %v1130
        %v1219 = vunpack.c.l.b16 %v1131
        %v1220 = vunpack.c.h.b16 %v1131
        %v1221 = vunpack.c.l.b16 %v1132
        %v1222 = vpack.c.b16 %v1177, %v1174
        %v1223 = vpack.c.b16 %v1178, %v1175
        %v1224 = vpack.c.b16 %v1179, %v1176
        %v1225 = vpack.c.b16 %v1183, %v1180
        %v1226 = vpack.c.b16 %v1184, %v1181
        %v1227 = vpack.c.b16 %v1185, %v1182
        %v1228 = vpack.c.b16 %v1189, %v1186
        %v1229 = vpack.c.b16 %v1190, %v1187
        %v1230 = vpack.c.b16 %v1191, %v1188
        %v1231 = vpack.c.b16 %v1195, %v1192
        %v1232 = vpack.c.b16 %v1196, %v1193
        %v1233 = vpack.c.b16 %v1197, %v1194
        %v1234 = vpack.c.b16 %v1201, %v1198
        %v1235 = vpack.c.b16 %v1202, %v1199
        %v1236 = vpack.c.b16 %v1203, %v1200
        %v1237 = vpack.c.b16 %v1207, %v1204
        %v1238 = vpack.c.b16 %v1208, %v1205
        %v1239 = vpack.c.b16 %v1209, %v1206
        %v1240 = vpack.c.b16 %v1213, %v1210
        %v1241 = vpack.c.b16 %v1214, %v1211
        %v1242 = vpack.c.b16 %v1215, %v1212
        %v1243 = vpack.c.b16 %v1219, %v1216
        %v1244 = vpack.c.b16 %v1220, %v1217
        %v1245 = vpack.c.b16 %v1221, %v1218
        %1270 = vmatpush.bf16.msra.mxu0 %v1243
        %1271 = vmatpush.bf16.msra.mxu0 %v1240
        %1272 = vmatpush.bf16.msra.mxu0 %v1237
        %1273 = vmatpush.bf16.msra.mxu0 %v1234
        %1274 = vmatpush.bf16.msra.mxu0 %v1231
        %1275 = vmatpush.bf16.msra.mxu0 %v1228
        %1276 = vmatpush.bf16.msra.mxu0 %v1225
        %1277 = vmatpush.bf16.msra.mxu0 %v1222
        %1278 = vmatmul.bf16.gmra.mxu0 %v1133
        %v1279 = vpop.f32.mrf.mxu0
        %v1280 = vadd.f32 %v1136, %v1279
        %v1281 = vpop.f32.mrf.mxu0
        %1282 = vdwg.mxu0
        %1283 = vmatpush.bf16.msra.mxu0 %v1244
        %1284 = vmatpush.bf16.msra.mxu0 %v1241
        %1285 = vmatpush.bf16.msra.mxu0 %v1238
        %1286 = vmatpush.bf16.msra.mxu0 %v1235
        %1287 = vmatpush.bf16.msra.mxu0 %v1232
        %1288 = vmatpush.bf16.msra.mxu0 %v1229
        %1289 = vmatpush.bf16.msra.mxu0 %v1226
        %1290 = vmatpush.bf16.msra.mxu0 %v1223
        %1291 = vmatmul.bf16.gmra.mxu0 %v1133
        %v1292 = vpop.f32.mrf.mxu0
        %v1293 = vadd.f32 %v1137, %v1292
        %v1294 = vpop.f32.mrf.mxu0
        %1295 = vdwg.mxu0
        %1296 = vmatpush.bf16.msra.mxu0 %v1245
        %1297 = vmatpush.bf16.msra.mxu0 %v1242
        %1298 = vmatpush.bf16.msra.mxu0 %v1239
        %1299 = vmatpush.bf16.msra.mxu0 %v1236
        %1300 = vmatpush.bf16.msra.mxu0 %v1233
        %1301 = vmatpush.bf16.msra.mxu0 %v1230
        %1302 = vmatpush.bf16.msra.mxu0 %v1227
        %1303 = vmatpush.bf16.msra.mxu0 %v1224
        %1304 = vmatmul.bf16.gmra.mxu0 %v1133
        %v1305 = vpop.f32.mrf.mxu0
        %v1306 = vadd.f32 %v1138, %v1305
        %v1307 = vpop.f32.mrf.mxu0
        %1308 = vdwg.mxu0
        %v1309 = vmax.f32 %v1280, 0.0
        %v1310 = vmax.f32 %v1293, 0.0
        %v1311 = vmax.f32 %v1306, 0.0
        %v1312 = vpack.c.bf16 %v1311, %v1309
        %vm1313 = vcmask 130048
        %v1315 = vsel %vm1313, %v831, 0
        %1317 = vmatpush.bf16.msra.mxu0 0
        %1318 = vmatpush.bf16.msra.mxu0 0
        %1319 = vmatpush.bf16.msra.mxu0 0
        %1320 = vmatpush.bf16.msra.mxu0 0
        %1321 = vmatpush.bf16.msra.mxu0 0
        %1322 = vmatpush.bf16.msra.mxu0 0
        %1323 = vmatpush.bf16.msra.mxu0 0
        %1324 = vmatpush.bf16.msra.mxu0 %v1312
        %1325 = vmatmul.bf16.gmra.mxu0 %v1315
        %v1326 = vpop.f32.mrf.mxu0
        %v1327 = vadd.f32 0.0, %v1326
        %v1328 = vpop.f32.mrf.mxu0
        %1329 = vdwg.mxu0
        %v1330 = vld [vmem:[%s7] sm:$0xff]
        %1332 = vset.pattern.permute.xlu0 0
        %1333 = vperm.xlu0 %1332, %v1330
        %v1334 = vpop.permute.xlu0 %1333
        %v1336 = vmul.f32 %v1327, %v1334
        %v1337 = vld [vmem:[%s775] sm:$0xf]
        %v1338 = vld [vmem:[%s775 + $0x4] sm:$0xf]
        %v1339 = vld [vmem:[%s775 + $0x8] sm:$0xf]
        %v1340 = vld [vmem:[%s775 + $0xc] sm:$0xf]
        %v1341 = vld [vmem:[%s775 + $0x10] sm:$0xf]
        %v1342 = vld [vmem:[%s775 + $0x14] sm:$0xf]
        %v1343 = vld [vmem:[%s775 + $0x18] sm:$0xf]
        %v1344 = vld [vmem:[%s775 + $0x1c] sm:$0xf]
        %v1345 = vld [vmem:[%s775 + $0x20] sm:$0xf]
        %v1346 = vld [vmem:[%s775 + $0x24] sm:$0xf]
        %v1347 = vld [vmem:[%s775 + $0x28] sm:$0xf]
        %v1348 = vld [vmem:[%s775 + $0x2c] sm:$0xf]
        %v1349 = vld [vmem:[%s775 + $0x30] sm:$0xf]
        %v1350 = vld [vmem:[%s775 + $0x34] sm:$0xf]
        %v1351 = vld [vmem:[%s775 + $0x38] sm:$0xf]
        %v1352 = vld [vmem:[%s775 + $0x3c] sm:$0xf]
        %v1353 = vpack.c.bf16 %v1336, %v1336
        %v1354 = vld [vmem:[%s778] sm:$0x1]
        %v1356 = vperm.slane %v1354, 0
        %v1374 = vunpack.c.l.b16 %v1337
        %v1375 = vunpack.c.l.b16 %v1338
        %v1376 = vunpack.c.l.b16 %v1339
        %v1377 = vunpack.c.l.b16 %v1340
        %v1378 = vunpack.c.l.b16 %v1341
        %v1379 = vunpack.c.l.b16 %v1342
        %v1380 = vunpack.c.l.b16 %v1343
        %v1381 = vunpack.c.l.b16 %v1344
        %v1382 = vunpack.c.l.b16 %v1345
        %v1383 = vunpack.c.l.b16 %v1346
        %v1384 = vunpack.c.l.b16 %v1347
        %v1385 = vunpack.c.l.b16 %v1348
        %v1386 = vunpack.c.l.b16 %v1349
        %v1387 = vunpack.c.l.b16 %v1350
        %v1388 = vunpack.c.l.b16 %v1351
        %v1389 = vunpack.c.l.b16 %v1352
        %v1390 = vpack.c.b16 %v1375, %v1374
        %v1391 = vpack.c.b16 %v1377, %v1376
        %v1392 = vpack.c.b16 %v1379, %v1378
        %v1393 = vpack.c.b16 %v1381, %v1380
        %v1394 = vpack.c.b16 %v1383, %v1382
        %v1395 = vpack.c.b16 %v1385, %v1384
        %v1396 = vpack.c.b16 %v1387, %v1386
        %v1397 = vpack.c.b16 %v1389, %v1388
        %1406 = vmatpush.bf16.msra.mxu0 %v1397
        %1407 = vmatpush.bf16.msra.mxu0 %v1396
        %1408 = vmatpush.bf16.msra.mxu0 %v1395
        %1409 = vmatpush.bf16.msra.mxu0 %v1394
        %1410 = vmatpush.bf16.msra.mxu0 %v1393
        %1411 = vmatpush.bf16.msra.mxu0 %v1392
        %1412 = vmatpush.bf16.msra.mxu0 %v1391
        %1413 = vmatpush.bf16.msra.mxu0 %v1390
        %1414 = vmatmul.bf16.gmra.mxu0 %v1353
        %v1415 = vpop.f32.mrf.mxu0
        %v1416 = vadd.f32 %v1356, %v1415
        %v1417 = vpop.f32.mrf.mxu0
        %1418 = vdwg.mxu0
        %v1419 = vmax.f32 %v1416, 0.0
        %v1420 = vld [vmem:[%s783] sm:$0xf]
        %v1421 = vld [vmem:[%s783 + $0x4] sm:$0xf]
        %v1422 = vld [vmem:[%s783 + $0x8] sm:$0xf]
        %v1423 = vld [vmem:[%s783 + $0xc] sm:$0xf]
        %v1424 = vld [vmem:[%s783 + $0x10] sm:$0xf]
        %v1425 = vld [vmem:[%s783 + $0x14] sm:$0xf]
        %v1426 = vld [vmem:[%s783 + $0x18] sm:$0xf]
        %v1427 = vld [vmem:[%s783 + $0x1c] sm:$0xf]
        %v1428 = vld [vmem:[%s783 + $0x20] sm:$0xf]
        %v1429 = vld [vmem:[%s783 + $0x24] sm:$0xf]
        %v1430 = vld [vmem:[%s783 + $0x28] sm:$0xf]
        %v1431 = vld [vmem:[%s783 + $0x2c] sm:$0xf]
        %v1432 = vld [vmem:[%s783 + $0x30] sm:$0xf]
        %v1433 = vld [vmem:[%s783 + $0x34] sm:$0xf]
        %v1434 = vld [vmem:[%s783 + $0x38] sm:$0xf]
        %v1435 = vld [vmem:[%s783 + $0x3c] sm:$0xf]
        %v1436 = vpack.c.bf16 %v1419, %v1419
        %v1437 = vld [vmem:[%s786] sm:$0x1]
        %v1439 = vperm.slane %v1437, 0
        %v1457 = vunpack.c.l.b16 %v1420
        %v1458 = vunpack.c.l.b16 %v1421
        %v1459 = vunpack.c.l.b16 %v1422
        %v1460 = vunpack.c.l.b16 %v1423
        %v1461 = vunpack.c.l.b16 %v1424
        %v1462 = vunpack.c.l.b16 %v1425
        %v1463 = vunpack.c.l.b16 %v1426
        %v1464 = vunpack.c.l.b16 %v1427
        %v1465 = vunpack.c.l.b16 %v1428
        %v1466 = vunpack.c.l.b16 %v1429
        %v1467 = vunpack.c.l.b16 %v1430
        %v1468 = vunpack.c.l.b16 %v1431
        %v1469 = vunpack.c.l.b16 %v1432
        %v1470 = vunpack.c.l.b16 %v1433
        %v1471 = vunpack.c.l.b16 %v1434
        %v1472 = vunpack.c.l.b16 %v1435
        %v1473 = vpack.c.b16 %v1458, %v1457
        %v1474 = vpack.c.b16 %v1460, %v1459
        %v1475 = vpack.c.b16 %v1462, %v1461
        %v1476 = vpack.c.b16 %v1464, %v1463
        %v1477 = vpack.c.b16 %v1466, %v1465
        %v1478 = vpack.c.b16 %v1468, %v1467
        %v1479 = vpack.c.b16 %v1470, %v1469
        %v1480 = vpack.c.b16 %v1472, %v1471
        %1489 = vmatpush.bf16.msra.mxu0 %v1480
        %1490 = vmatpush.bf16.msra.mxu0 %v1479
        %1491 = vmatpush.bf16.msra.mxu0 %v1478
        %1492 = vmatpush.bf16.msra.mxu0 %v1477
        %1493 = vmatpush.bf16.msra.mxu0 %v1476
        %1494 = vmatpush.bf16.msra.mxu0 %v1475
        %1495 = vmatpush.bf16.msra.mxu0 %v1474
        %1496 = vmatpush.bf16.msra.mxu0 %v1473
        %1497 = vmatmul.bf16.gmra.mxu0 %v1436
        %v1498 = vpop.f32.mrf.mxu0
        %v1499 = vadd.f32 %v1439, %v1498
        %v1500 = vpop.f32.mrf.mxu0
        %1501 = vdwg.mxu0
        %v1502 = vmax.f32 %v1499, 0.0
        %1503 = vst [vmem:[#allocation4] sm:$0xff] %v1502
        %1504 = vst [vmem:[#allocation5] sm:$0xff] %v1310
        %p1505 = scmp.eq.s32.totalorder %s35, 2
        // Predicated region
        $region109: #{cgip_forward.1} parent=103 // pred_check
          %p1506 = pneg %p1505
        $region110: #{cgip_forward.1} parent=103 // pred_check_branch
          %1508 = sbr.rel (%p1506) target = $region112
        $region111: #{cgip_forward.1} parent=103 // pred_region
          %v1509 = vlaneseq
          %v1510 = vshrl.u32 %v1509, 7
          %v1511 = vld [vmem:[%s4] sm:$0x1]
          %v1512 = vperm.slane %v1511, 0
          %vm1513 = vcmp.eq.s32.totalorder %v1510, %v1512
          %v1514 = vsel %vm1513, 1, 0
          %v1515 = vcvt.s32.f32 %v1514
          %v1516 = vpack.c.bf16 %v1515, %v1515
          %v1517 = vld [vmem:[%s5] sm:$0x1]
          %v1518 = vperm.slane %v1517, 0
          %vm1519 = vcmp.eq.s32.totalorder %v1510, %v1518
          %v1520 = vsel %vm1519, 1, 0
          %v1521 = vcvt.s32.f32 %v1520
          %v1522 = vpack.c.bf16 %v1521, %v1521
          %v1523 = vpack.c.bf16 %v1502, %v1502
          %v1525 = vsel %vm838, %v1516, 0
          %v1528 = vsel %vm842, %v1523, 0
          %1530 = vmatpush.bf16.msra.mxu0 0
          %1531 = vmatpush.bf16.msra.mxu0 0
          %1532 = vmatpush.bf16.msra.mxu0 0
          %1533 = vmatpush.bf16.msra.mxu0 0
          %1534 = vmatpush.bf16.msra.mxu0 0
          %1535 = vmatpush.bf16.msra.mxu0 0
          %1536 = vmatpush.bf16.msra.mxu0 0
          %1537 = vmatpush.bf16.msra.mxu0 %v1528
          %1538 = vmatmul.bf16.gmra.mxu0 %v1525
          %v1539 = vpop.f32.mrf.mxu0
          %v1540 = vadd.f32 0.0, %v1539
          %v1541 = vpop.f32.mrf.mxu0
          %1542 = vdwg.mxu0
          %v1543 = vld [vmem:[%s8] sm:$0x3]
          %1545 = vset.pattern.permute.xlu0 0
          %1546 = vperm.xlu0 %1545, %v1543
          %v1547 = vpop.permute.xlu0 %1546
          %v1549 = vmul.f32 %v1540, %v1547
          %v1550 = vpack.c.bf16 %v1310, %v1310
          %v1552 = vsel %vm838, %v1522, 0
          %v1555 = vsel %vm842, %v1550, 0
          %1557 = vmatpush.bf16.msra.mxu0 0
          %1558 = vmatpush.bf16.msra.mxu0 0
          %1559 = vmatpush.bf16.msra.mxu0 0
          %1560 = vmatpush.bf16.msra.mxu0 0
          %1561 = vmatpush.bf16.msra.mxu0 0
          %1562 = vmatpush.bf16.msra.mxu0 0
          %1563 = vmatpush.bf16.msra.mxu0 0
          %1564 = vmatpush.bf16.msra.mxu0 %v1555
          %1565 = vmatmul.bf16.gmra.mxu0 %v1552
          %v1566 = vpop.f32.mrf.mxu0
          %v1567 = vadd.f32 0.0, %v1566
          %v1568 = vpop.f32.mrf.mxu0
          %1569 = vdwg.mxu0
          %v1570 = vld [vmem:[%s9] sm:$0x3]
          %1572 = vset.pattern.permute.xlu0 0
          %1573 = vperm.xlu0 %1572, %v1570
          %v1574 = vpop.permute.xlu0 %1573
          %v1576 = vmul.f32 %v1567, %v1574
          %v1577 = vld [vmem:[%s18] sm:$0xf]
          %v1578 = vld [vmem:[%s18 + $0x4] sm:$0xf]
          %v1579 = vld [vmem:[%s18 + $0x8] sm:$0xf]
          %v1580 = vld [vmem:[%s18 + $0xc] sm:$0xf]
          %v1581 = vld [vmem:[%s18 + $0x10] sm:$0xf]
          %v1582 = vld [vmem:[%s18 + $0x14] sm:$0xf]
          %v1583 = vld [vmem:[%s18 + $0x18] sm:$0xf]
          %v1584 = vld [vmem:[%s18 + $0x1c] sm:$0xf]
          %v1585 = vld [vmem:[%s18 + $0x20] sm:$0xf]
          %v1586 = vld [vmem:[%s18 + $0x24] sm:$0xf]
          %v1587 = vld [vmem:[%s18 + $0x28] sm:$0xf]
          %v1588 = vld [vmem:[%s18 + $0x2c] sm:$0xf]
          %v1589 = vld [vmem:[%s18 + $0x30] sm:$0xf]
          %v1590 = vld [vmem:[%s18 + $0x34] sm:$0xf]
          %v1591 = vld [vmem:[%s18 + $0x38] sm:$0xf]
          %v1592 = vld [vmem:[%s18 + $0x3c] sm:$0xf]
          %v1593 = vpack.c.bf16 %v1549, %v1549
          %v1594 = vld [vmem:[%s19] sm:$0xf]
          %v1595 = vld [vmem:[%s19 + $0x4] sm:$0xf]
          %v1596 = vld [vmem:[%s19 + $0x8] sm:$0xf]
          %v1597 = vld [vmem:[%s19 + $0xc] sm:$0xf]
          %v1598 = vld [vmem:[%s19 + $0x10] sm:$0xf]
          %v1599 = vld [vmem:[%s19 + $0x14] sm:$0xf]
          %v1600 = vld [vmem:[%s19 + $0x18] sm:$0xf]
          %v1601 = vld [vmem:[%s19 + $0x1c] sm:$0xf]
          %v1602 = vld [vmem:[%s19 + $0x20] sm:$0xf]
          %v1603 = vld [vmem:[%s19 + $0x24] sm:$0xf]
          %v1604 = vld [vmem:[%s19 + $0x28] sm:$0xf]
          %v1605 = vld [vmem:[%s19 + $0x2c] sm:$0xf]
          %v1606 = vld [vmem:[%s19 + $0x30] sm:$0xf]
          %v1607 = vld [vmem:[%s19 + $0x34] sm:$0xf]
          %v1608 = vld [vmem:[%s19 + $0x38] sm:$0xf]
          %v1609 = vld [vmem:[%s19 + $0x3c] sm:$0xf]
          %v1610 = vpack.c.bf16 %v1576, %v1576
          %v1627 = vunpack.c.l.b16 %v1594
          %v1628 = vunpack.c.l.b16 %v1595
          %v1629 = vunpack.c.l.b16 %v1596
          %v1630 = vunpack.c.l.b16 %v1597
          %v1631 = vunpack.c.l.b16 %v1598
          %v1632 = vunpack.c.l.b16 %v1599
          %v1633 = vunpack.c.l.b16 %v1600
          %v1634 = vunpack.c.l.b16 %v1601
          %v1635 = vunpack.c.l.b16 %v1602
          %v1636 = vunpack.c.l.b16 %v1603
          %v1637 = vunpack.c.l.b16 %v1604
          %v1638 = vunpack.c.l.b16 %v1605
          %v1639 = vunpack.c.l.b16 %v1606
          %v1640 = vunpack.c.l.b16 %v1607
          %v1641 = vunpack.c.l.b16 %v1608
          %v1642 = vunpack.c.l.b16 %v1609
          %v1643 = vpack.c.b16 %v1628, %v1627
          %v1644 = vpack.c.b16 %v1630, %v1629
          %v1645 = vpack.c.b16 %v1632, %v1631
          %v1646 = vpack.c.b16 %v1634, %v1633
          %v1647 = vpack.c.b16 %v1636, %v1635
          %v1648 = vpack.c.b16 %v1638, %v1637
          %v1649 = vpack.c.b16 %v1640, %v1639
          %v1650 = vpack.c.b16 %v1642, %v1641
          %1659 = vmatpush.bf16.msra.mxu0 %v1650
          %1660 = vmatpush.bf16.msra.mxu0 %v1649
          %1661 = vmatpush.bf16.msra.mxu0 %v1648
          %1662 = vmatpush.bf16.msra.mxu0 %v1647
          %1663 = vmatpush.bf16.msra.mxu0 %v1646
          %1664 = vmatpush.bf16.msra.mxu0 %v1645
          %1665 = vmatpush.bf16.msra.mxu0 %v1644
          %1666 = vmatpush.bf16.msra.mxu0 %v1643
          %1667 = vmatmul.bf16.gmra.mxu0 %v1610
          %v1668 = vpop.f32.mrf.mxu0
          %v1669 = vadd.f32 0.0, %v1668
          %v1670 = vpop.f32.mrf.mxu0
          %1671 = vdwg.mxu0
          %v1688 = vunpack.c.l.b16 %v1577
          %v1689 = vunpack.c.l.b16 %v1578
          %v1690 = vunpack.c.l.b16 %v1579
          %v1691 = vunpack.c.l.b16 %v1580
          %v1692 = vunpack.c.l.b16 %v1581
          %v1693 = vunpack.c.l.b16 %v1582
          %v1694 = vunpack.c.l.b16 %v1583
          %v1695 = vunpack.c.l.b16 %v1584
          %v1696 = vunpack.c.l.b16 %v1585
          %v1697 = vunpack.c.l.b16 %v1586
          %v1698 = vunpack.c.l.b16 %v1587
          %v1699 = vunpack.c.l.b16 %v1588
          %v1700 = vunpack.c.l.b16 %v1589
          %v1701 = vunpack.c.l.b16 %v1590
          %v1702 = vunpack.c.l.b16 %v1591
          %v1703 = vunpack.c.l.b16 %v1592
          %v1704 = vpack.c.b16 %v1689, %v1688
          %v1705 = vpack.c.b16 %v1691, %v1690
          %v1706 = vpack.c.b16 %v1693, %v1692
          %v1707 = vpack.c.b16 %v1695, %v1694
          %v1708 = vpack.c.b16 %v1697, %v1696
          %v1709 = vpack.c.b16 %v1699, %v1698
          %v1710 = vpack.c.b16 %v1701, %v1700
          %v1711 = vpack.c.b16 %v1703, %v1702
          %1720 = vmatpush.bf16.msra.mxu0 %v1711
          %1721 = vmatpush.bf16.msra.mxu0 %v1710
          %1722 = vmatpush.bf16.msra.mxu0 %v1709
          %1723 = vmatpush.bf16.msra.mxu0 %v1708
          %1724 = vmatpush.bf16.msra.mxu0 %v1707
          %1725 = vmatpush.bf16.msra.mxu0 %v1706
          %1726 = vmatpush.bf16.msra.mxu0 %v1705
          %1727 = vmatpush.bf16.msra.mxu0 %v1704
          %1728 = vmatmul.bf16.gmra.mxu0 %v1593
          %v1729 = vpop.f32.mrf.mxu0
          %v1730 = vadd.f32 %v1669, %v1729
          %v1731 = vpop.f32.mrf.mxu0
          %1732 = vdwg.mxu0
          %v1733 = vld [vmem:[%s20] sm:$0x1]
          %v1735 = vperm.slane %v1733, 0
          %v1737 = vadd.f32 %v1730, %v1735
          %1738 = vst [vmem:[#allocation6] sm:$0x3] %v1737
          %1739 = vmatpush.bf16.msra.mxu0 0
          %1740 = vmatpush.bf16.msra.mxu0 0
          %1741 = vmatpush.bf16.msra.mxu0 0
          %1742 = vmatpush.bf16.msra.mxu0 0
          %1743 = vmatpush.bf16.msra.mxu0 0
          %1744 = vmatpush.bf16.msra.mxu0 0
          %1745 = vmatpush.bf16.msra.mxu0 0
          %1746 = vmatpush.bf16.msra.mxu0 %v1528
          %1747 = vmatmul.bf16.gmra.mxu0 %v840
          %v1748 = vpop.f32.mrf.mxu0
          %v1749 = vadd.f32 0.0, %v1748
          %v1750 = vpop.f32.mrf.mxu0
          %v1751 = vadd.f32 0.0, %v1750
          %1752 = vdwg.mxu0
          %v1753 = vadd.s32 %v1510, 8
          %v1754 = vld [vmem:[%s6] sm:$0x1]
          %v1755 = vperm.slane %v1754, 0
          %vm1756 = vcmp.eq.s32.totalorder %v1510, %v1755
          %vm1757 = vcmp.eq.s32.totalorder %v1753, %v1755
          %v1758 = vsel %vm1756, 1, 0
          %v1759 = vsel %vm1757, 1, 0
          %v1760 = vcvt.s32.f32 %v1758
          %v1761 = vcvt.s32.f32 %v1759
          %v1762 = vpack.c.bf16 %v1761, %v1760
          %v1763 = vpack.c.bf16 %v1749, %v1749
          %v1764 = vpack.c.bf16 %v1751, %v1751
          %v1766 = vsel %vm838, %v1762, 0
          %v1769 = vsel %vm842, %v1763, 0
          %v1772 = vsel %vm842, %v1764, 0
          %1774 = vmatpush.bf16.msra.mxu0 0
          %1775 = vmatpush.bf16.msra.mxu0 0
          %1776 = vmatpush.bf16.msra.mxu0 0
          %1777 = vmatpush.bf16.msra.mxu0 0
          %1778 = vmatpush.bf16.msra.mxu0 0
          %1779 = vmatpush.bf16.msra.mxu0 0
          %1780 = vmatpush.bf16.msra.mxu0 0
          %1781 = vmatpush.bf16.msra.mxu0 %v1769
          %1782 = vmatmul.bf16.gmra.mxu0 %v1766
          %v1783 = vpop.f32.mrf.mxu0
          %v1784 = vadd.f32 0.0, %v1783
          %v1785 = vpop.f32.mrf.mxu0
          %v1786 = vadd.f32 0.0, %v1785
          %1787 = vdwg.mxu0
          %1788 = vmatpush.bf16.msra.mxu0 0
          %1789 = vmatpush.bf16.msra.mxu0 0
          %1790 = vmatpush.bf16.msra.mxu0 0
          %1791 = vmatpush.bf16.msra.mxu0 0
          %1792 = vmatpush.bf16.msra.mxu0 0
          %1793 = vmatpush.bf16.msra.mxu0 0
          %1794 = vmatpush.bf16.msra.mxu0 0
          %1795 = vmatpush.bf16.msra.mxu0 %v1555
          %1796 = vmatmul.bf16.gmra.mxu0 %v1766
          %v1797 = vpop.f32.mrf.mxu0
          %v1798 = vadd.f32 0.0, %v1797
          %v1799 = vpop.f32.mrf.mxu0
          %v1800 = vadd.f32 0.0, %v1799
          %1801 = vdwg.mxu0
          %1802 = vmatpush.bf16.msra.mxu0 0
          %1803 = vmatpush.bf16.msra.mxu0 0
          %1804 = vmatpush.bf16.msra.mxu0 0
          %1805 = vmatpush.bf16.msra.mxu0 0
          %1806 = vmatpush.bf16.msra.mxu0 0
          %1807 = vmatpush.bf16.msra.mxu0 0
          %1808 = vmatpush.bf16.msra.mxu0 0
          %1809 = vmatpush.bf16.msra.mxu0 %v1772
          %1810 = vmatmul.bf16.gmra.mxu0 %v1766
          %v1811 = vpop.f32.mrf.mxu0
          %v1812 = vadd.f32 0.0, %v1811
          %v1813 = vpop.f32.mrf.mxu0
          %v1814 = vadd.f32 0.0, %v1813
          %1815 = vdwg.mxu0
          %1816 = vst [vmem:[%s22] sm:$0xff] %v1784
          %1817 = vst [vmem:[%s22 + $0x8] sm:$0xff] %v1798
          %1818 = vst [vmem:[%s22 + $0x10] sm:$0xff] %v1812
          %1819 = vst [vmem:[%s22 + $0x18] sm:$0xff] %v1786
          %1820 = vst [vmem:[%s22 + $0x20] sm:$0xff] %v1800
          %1821 = vst [vmem:[%s22 + $0x28] sm:$0xff] %v1814
        $region112: #{cgip_forward.1} parent=103 // pred_fallthru
          _
        // Predicated region
        $region113: #{cgip_forward.1} parent=103 // pred_check
          %p1822 = pneg %p529
        $region114: #{cgip_forward.1} parent=103 // pred_check_branch
          %1824 = sbr.rel (%p1822) target = $region116
        $region115: #{cgip_forward.1} parent=103 // pred_region
          %1826 = vsyncadd [#allocation7], 0
          %s1828 = sshll.u32 [#allocation6], 4
          %s1829 = int_to_ptr.vmem [resolvable:$true] %s1828
          %s1830 = sshll.u32 %s21, 4
          %s1831 = int_to_ptr.hbm [resolvable:$true] %s1830
          %1833 = dma.vmem_to_hbm [thread:$0]  %s1829, 32, %s1831, [#allocation7]
        $region116: #{cgip_forward.1} parent=103 // pred_fallthru
          _
        // Predicated region
        $region117: #{cgip_forward.1} parent=103 // pred_check
          %p1834 = pneg %p550
        $region118: #{cgip_forward.1} parent=103 // pred_check_branch
          %1836 = sbr.rel (%p1834) target = $region120
        $region119: #{cgip_forward.1} parent=103 // pred_region
          _
        $region120: #{cgip_forward.1} parent=103 // pred_fallthru
          _
        // Predicated region
        $region121: #{cgip_forward.1} parent=103 // pred_check
          %p1837 = pneg %p529
        $region122: #{cgip_forward.1} parent=103 // pred_check_branch
          %1839 = sbr.rel (%p1837) target = $region124
        $region123: #{cgip_forward.1} parent=103 // pred_region
          %1841 = dma.done [#allocation7], 32
        $region124: #{cgip_forward.1} parent=103 // pred_fallthru
          _
        // Predicated region
        $region125: #{cgip_forward.1} parent=103 // pred_check
          %p1842 = pneg %p550
        $region126: #{cgip_forward.1} parent=103 // pred_check_branch
          %1844 = sbr.rel (%p1842) target = $region128
        $region127: #{cgip_forward.1} parent=103 // pred_region
          _
        $region128: #{cgip_forward.1} parent=103 // pred_fallthru
          _
      $region104: #{cgip_forward.1} parent=5 // pred_fallthru
        _
      %p1845 = scmp.le.s32.totalorder 2, %s30
      // Predicated region
      $region129: #{cgip_forward.1} parent=5 // pred_check
        %p1846 = pneg %p1845
      $region130: #{cgip_forward.1} parent=5 // pred_check_branch
        %1848 = sbr.rel (%p1846) target = $region132
      $region131: #{cgip_forward.1} parent=5 // pred_region
        %s1849 = ssub.s32 %s30, 2
      $region132: #{cgip_forward.1} parent=5 // pred_fallthru
        _
    $region6: #{cgip_forward.1} parent=1 // loop_footer
      %s34 = sadd.s32 1, %s30
    $region7: #{cgip_forward.1} parent=1 // loop_footer_branch
      %29 = sbr.rel target = $region3
    $region8: #{cgip_forward.1} parent=1 // loop_exit
      _
    %1850 = vsyncpa [#allocation7], 1
    %s1851 = scalar_lea.sflag [#allocation7], 1
    %1852 = vsyncpa %s1851, 1

</llo_original>
